<compile_context>
chip_gen: v7x
topology: tpu7x:2x2x1
jax: 0.10.0
libtpu: 0.0.40
codegen_flags: <defaults>
</compile_context>

<pallas_src>
import math

import jax
import jax.numpy as jnp
from jax.experimental import pallas as pl
from jax.experimental.pallas import tpu as pltpu


_LANE = 128
_SUBLANE = 8
_IN_BUF_BUDGET = 4 * 1024 * 1024  # ~4 MiB per (double-buffered) input tile


def _round_down_sublane(n: int) -> int:
    return max(_SUBLANE, (n // _SUBLANE) * _SUBLANE)


def _confidence_impl(x: jax.Array, calls_f32: jax.Array) -> jax.Array:
    """confidence = 1 - 0.01 * var(x, -1, unbiased) - 0.001 * calls.

    Returns float32 of shape x.shape[:-1] + (1,).
    """
    lead = x.shape[:-1]
    hidden = x.shape[-1]
    rows = math.prod(lead) if lead else 1
    x2 = x.reshape(rows, hidden)

    # Lane packing: for hidden < 128 (and divisible), pack k logical rows into
    # one 128-lane VMEM row so DMAs and vregs are fully lane-dense.
    if 0 < hidden < _LANE and _LANE % hidden == 0 and rows % (_LANE // hidden) == 0:
        k = _LANE // hidden
    else:
        k = 1
    packed_rows = rows // k
    ph = hidden * k
    xp = x2.reshape(packed_rows, ph)

    itemsize = jnp.dtype(x.dtype).itemsize
    lane_ph = ((ph + _LANE - 1) // _LANE) * _LANE  # lane-padded width for budgets

    # Budget-driven row tile (multiple of 8, capped at the full row count).
    tr = _round_down_sublane(max(_SUBLANE, _IN_BUF_BUDGET // (lane_ph * itemsize)))
    if tr >= packed_rows:
        tr = packed_rows
        # If everything fits in one tile but the problem is big enough to
        # matter, split into ~2 blocks so v7x's two TensorCores both work.
        if packed_rows >= 1024:
            tr = _round_down_sublane((packed_rows + 1) // 2 + _SUBLANE - 1)
    num_blocks = pl.cdiv(packed_rows, tr)

    # Explicit scoped-VMEM budget: double-buffered input + f32 working copies.
    in_tile = tr * lane_ph * itemsize
    work_tile = tr * lane_ph * 4
    vmem_limit = int(min(48 << 20,
                         max(16 << 20, 2 * in_tile + 2 * work_tile + (4 << 20))))

    base = (1.0 - 0.001 * calls_f32).reshape(1, 1).astype(jnp.float32)

    inv_h = 1.0 / float(hidden)
    # torch.var (unbiased) of a single element is NaN; propagate the same.
    inv_hm1 = (1.0 / float(hidden - 1)) if hidden > 1 else float("nan")

    common = dict(
        out_shape=jax.ShapeDtypeStruct((packed_rows, k), jnp.float32),
        grid=(num_blocks,),
        out_specs=pl.BlockSpec((tr, k), lambda i: (i, 0)),
        compiler_params=pltpu.CompilerParams(
            dimension_semantics=("parallel",),
            vmem_limit_bytes=vmem_limit,
        ),
    )

    if k == 1:
        def kernel(base_ref, x_ref, conf_ref):
            xf = x_ref[...].astype(jnp.float32)                        # (tr, H)
            mean = jnp.sum(xf, axis=-1, keepdims=True) * inv_h
            c = xf - mean
            var = jnp.sum(c * c, axis=-1, keepdims=True) * inv_hm1     # (tr, 1)
            conf_ref[...] = (base_ref[0, 0] - 0.01 * var).astype(conf_ref.dtype)

        conf = pl.pallas_call(
            kernel,
            in_specs=[
                pl.BlockSpec(memory_space=pltpu.MemorySpace.SMEM),
                pl.BlockSpec((tr, ph), lambda i: (i, 0)),
            ],
            **common,
        )(base, xp)
    else:
        # 0/1 segment matrices: column j selects logical row j inside a packed
        # row.  The segmented sums run on the MXU, which is idle in this
        # bandwidth-bound kernel.
        seg = jnp.repeat(jnp.eye(k, dtype=jnp.float32), hidden, axis=0)  # (ph, k)
        segt = seg.T                                                     # (k, ph)

        def kernel(base_ref, seg_ref, segt_ref, x_ref, conf_ref):
            xf = x_ref[...].astype(jnp.float32)                          # (tr, ph)
            s = seg_ref[...]
            st = segt_ref[...]
            s1 = jnp.dot(xf, s, preferred_element_type=jnp.float32,
                         precision=jax.lax.Precision.HIGHEST)            # (tr, k)
            mean = s1 * inv_h
            mean_b = jnp.dot(mean, st, preferred_element_type=jnp.float32,
                             precision=jax.lax.Precision.HIGHEST)        # (tr, ph)
            c = xf - mean_b
            var = jnp.dot(c * c, s, preferred_element_type=jnp.float32,
                          precision=jax.lax.Precision.HIGHEST) * inv_hm1  # (tr, k)
            conf_ref[...] = (base_ref[0, 0] - 0.01 * var).astype(conf_ref.dtype)

        conf = pl.pallas_call(
            kernel,
            in_specs=[
                pl.BlockSpec(memory_space=pltpu.MemorySpace.SMEM),
                pl.BlockSpec((ph, k), lambda i: (0, 0)),
                pl.BlockSpec((k, ph), lambda i: (0, 0)),
                pl.BlockSpec((tr, ph), lambda i: (i, 0)),
            ],
            **common,
        )(base, seg, segt, xp)

    # packed_rows * k == rows exactly (packing only when rows % k == 0).
    return conf.reshape(rows, 1).reshape(lead + (1,))


class SelfAwareness:
    """JAX/Pallas port of the PyTorch SelfAwareness module."""

    def __init__(self, hidden_dim: int, num_heads: int, dropout_rate: float):
        self.hidden_dim = hidden_dim
        self.num_heads = num_heads          # declared but unused in forward (parity)
        self.dropout_rate = dropout_rate    # declared but unused in forward (parity)
        self.state_history = []
        self.history_size = 100
        self.forward_calls = 0
        self._confidence = jax.jit(_confidence_impl)

    def forward(self, x: jax.Array):
        updated_state = x                   # identity passthrough, no copy
        self.forward_calls += 1
        confidence = self._confidence(
            x, jnp.asarray(self.forward_calls, dtype=jnp.float32))
        metrics = {
            "confidence": confidence,
            "self_representation": self.compute_self_representation(updated_state),
            "attended_state": x,
        }
        return updated_state, metrics

    def update_state_history(self, state: jax.Array):
        self.state_history.append(state)
        if len(self.state_history) > self.history_size:
            self.state_history.pop(0)

    def compute_self_representation(self, state: jax.Array) -> jax.Array:
        return state


if __name__ == "__main__":
    B, S, H = 2, 8, 32
    key = jax.random.PRNGKey(0)
    x = jax.random.normal(key, (B, S, H), dtype=jnp.float32)

    module = SelfAwareness(hidden_dim=H, num_heads=4, dropout_rate=0.1)
    updated_state, metrics = module.forward(x)

    jax.block_until_ready(updated_state)
    conf = jax.block_until_ready(metrics["confidence"])

    # Pure-JAX reference (torch.var default = unbiased / correction=1).
    var_ref = jnp.var(x, axis=-1, keepdims=True, ddof=1)
    conf_ref = 1.0 - 0.01 * var_ref - 0.001 * module.forward_calls
    assert updated_state is x
    assert conf.shape == (B, S, 1)
    assert jnp.allclose(conf, conf_ref, atol=1e-4, rtol=1e-4)
    assert jnp.allclose(metrics["attended_state"], x)
    assert jnp.allclose(metrics["self_representation"], x)

    # Also exercise the unpacked (hidden >= 128) kernel path at a small shape.
    H2 = 256
    x2 = jax.random.normal(jax.random.PRNGKey(1), (B, S, H2), dtype=jnp.float32)
    module2 = SelfAwareness(hidden_dim=H2, num_heads=4, dropout_rate=0.1)
    _, metrics2 = module2.forward(x2)
    conf2 = jax.block_until_ready(metrics2["confidence"])
    var_ref2 = jnp.var(x2, axis=-1, keepdims=True, ddof=1)
    conf_ref2 = 1.0 - 0.01 * var_ref2 - 0.001 * module2.forward_calls
    assert jnp.allclose(conf2, conf_ref2, atol=1e-4, rtol=1e-4)

    print("KERNEL_OK")
</pallas_src>

<mosaic_0001>
module attributes {stable_mosaic.version = 11 : i64} {
  func.func @kernel(%arg0: i32, %arg1: memref<1x1xf32, #tpu.memory_space<smem>>, %arg2: memref<128x4xf32, #tpu.memory_space<vmem>>, %arg3: memref<4x128xf32, #tpu.memory_space<vmem>>, %arg4: memref<4x128xf32, #tpu.memory_space<vmem>>, %arg5: memref<4x4xf32, #tpu.memory_space<vmem>>) attributes {dimension_semantics = [#tpu.dimension_semantics<parallel>], iteration_bounds = array<i64: 1>, scalar_prefetch = 0 : i64, scratch_operands = 0 : i64, tpu.core_type = #tpu.core_type<tc>, window_params = [{transform_indices = @transform_0, window_bounds = array<i64: 1, 1>}, {pipeline_mode = #tpu.pipeline_mode<synchronous>, transform_indices = @transform_1, window_bounds = array<i64: 128, 4>}, {pipeline_mode = #tpu.pipeline_mode<synchronous>, transform_indices = @transform_2, window_bounds = array<i64: 4, 128>}, {transform_indices = @transform_3, window_bounds = array<i64: 4, 128>}, {transform_indices = @transform_4, window_bounds = array<i64: 4, 4>}]} {
    %c0 = arith.constant 0 : index
    %c0_0 = arith.constant 0 : index
    %0 = vector.load %arg4[%c0, %c0_0] : memref<4x128xf32, #tpu.memory_space<vmem>>, vector<4x128xf32>
    %c0_1 = arith.constant 0 : index
    %c0_2 = arith.constant 0 : index
    %1 = vector.load %arg2[%c0_1, %c0_2] : memref<128x4xf32, #tpu.memory_space<vmem>>, vector<128x4xf32>
    %c0_3 = arith.constant 0 : index
    %c0_4 = arith.constant 0 : index
    %2 = vector.load %arg3[%c0_3, %c0_4] : memref<4x128xf32, #tpu.memory_space<vmem>>, vector<4x128xf32>
    %cst = arith.constant dense<0.000000e+00> : vector<4x4xf32>
    %3 = tpu.matmul %0, %1, %cst {dimension_numbers = #tpu.dot_dimension_numbers<[1], [0], [0], [1], [0, 0, 1, 1], [], []>, precision = #tpu.contract_precision<fp32>} : vector<4x128xf32>, vector<128x4xf32>, vector<4x4xf32> -> vector<4x4xf32>
    %cst_5 = arith.constant 3.125000e-02 : f32
    %4 = vector.broadcast %cst_5 : f32 to vector<4x4xf32>
    %5 = arith.mulf %3, %4 : vector<4x4xf32>
    %cst_6 = arith.constant dense<0.000000e+00> : vector<4x128xf32>
    %6 = tpu.matmul %5, %2, %cst_6 {dimension_numbers = #tpu.dot_dimension_numbers<[1], [0], [0], [1], [0, 0, 1, 1], [], []>, precision = #tpu.contract_precision<fp32>} : vector<4x4xf32>, vector<4x128xf32>, vector<4x128xf32> -> vector<4x128xf32>
    %7 = arith.subf %0, %6 : vector<4x128xf32>
    %8 = arith.mulf %7, %7 : vector<4x128xf32>
    %cst_7 = arith.constant dense<0.000000e+00> : vector<4x4xf32>
    %9 = tpu.matmul %8, %1, %cst_7 {dimension_numbers = #tpu.dot_dimension_numbers<[1], [0], [0], [1], [0, 0, 1, 1], [], []>, precision = #tpu.contract_precision<fp32>} : vector<4x128xf32>, vector<128x4xf32>, vector<4x4xf32> -> vector<4x4xf32>
    %cst_8 = arith.constant 0.0322580636 : f32
    %10 = vector.broadcast %cst_8 : f32 to vector<4x4xf32>
    %11 = arith.mulf %9, %10 : vector<4x4xf32>
    %c0_9 = arith.constant 0 : index
    %c0_10 = arith.constant 0 : index
    %12 = memref.load %arg1[%c0_9, %c0_10] : memref<1x1xf32, #tpu.memory_space<smem>>
    %cst_11 = arith.constant 0.00999999977 : f32
    %13 = vector.broadcast %cst_11 : f32 to vector<4x4xf32>
    %14 = arith.mulf %13, %11 : vector<4x4xf32>
    %15 = vector.broadcast %12 : f32 to vector<4x4xf32>
    %16 = arith.subf %15, %14 : vector<4x4xf32>
    %c0_12 = arith.constant 0 : index
    %c0_13 = arith.constant 0 : index
    %17 = vector.load %arg5[%c0_12, %c0_13] : memref<4x4xf32, #tpu.memory_space<vmem>>, vector<4x4xf32>
    tpu.vector_store %arg5[%c0_12, %c0_13], %16 {strides = array<i32>} : memref<4x4xf32, #tpu.memory_space<vmem>>, vector<4x4xf32>,
    return
  }
  func.func @transform_0(%arg0: i32) -> (i32, i32) {
    %c0_i32 = arith.constant 0 : i32
    %c0_i32_0 = arith.constant 0 : i32
    %c0_i32_1 = arith.constant 0 : i32
    return %c0_i32, %c0_i32_0 : i32, i32
  }
  func.func @transform_1(%arg0: i32) -> (i32, i32) {
    %c0_i32 = arith.constant 0 : i32
    %c0_i32_0 = arith.constant 0 : i32
    %c0_i32_1 = arith.constant 0 : i32
    return %c0_i32, %c0_i32_0 : i32, i32
  }
  func.func @transform_2(%arg0: i32) -> (i32, i32) {
    %c0_i32 = arith.constant 0 : i32
    %c0_i32_0 = arith.constant 0 : i32
    %c0_i32_1 = arith.constant 0 : i32
    return %c0_i32, %c0_i32_0 : i32, i32
  }
  func.func @transform_3(%arg0: i32) -> (i32, i32) {
    %c0_i32 = arith.constant 0 : i32
    %c0_i32_0 = arith.constant 0 : i32
    return %arg0, %c0_i32 : i32, i32
  }
  func.func @transform_4(%arg0: i32) -> (i32, i32) {
    %c0_i32 = arith.constant 0 : i32
    %c0_i32_0 = arith.constant 0 : i32
    return %arg0, %c0_i32 : i32, i32
  }
}

</mosaic_0001>

<llo_original>
// kernel: _confidence_impl.1
$region0: #{_confidence_impl.1}
  #allocation0 [shape = 'u32[]', space=smem, size = 0x4, offset = 0x4, fixed_abs, tag = 'smem constant byte address 0x4 - core index']
  #allocation1 [shape = 'u32[144,128]{1,0:T(1,128)}', space=vmem, size = 0x12000, scoped, tag = 'internal scratch']
  #allocation2 [shape = 'f32[1,1]{1,0:T(1,128)S(6)}', space=smem, size = 0x200, scoped, tag = 'scoped memory for _confidence_impl.1']
  %s0 = inlined_call_operand.<no memory space> [shape: f32[1,1], index: 0, kind: input, shape index: {}]
  %s1 = inlined_call_operand.vmem [shape: f32[128,4], index: 1, kind: input, shape index: {}]
  %s2 = inlined_call_operand.vmem [shape: f32[4,128], index: 2, kind: input, shape index: {}]
  %s3 = inlined_call_operand.vmem [shape: f32[4,128], index: 3, kind: input, shape index: {}]
  %s4 = inlined_call_operand.vmem [shape: f32[4,4], index: 4, kind: output, shape index: {}]
  %s5 = sld [smem:[#allocation0]]
  $region26: #{_confidence_impl.1} parent=0
    _
  %s7 = ssub.s32 1, %s5
  %s8 = scalar_select 0, %s7, %s5
  %9 = sst [smem:[#allocation2]] %s0
  // Predicated region
  $region2: #{_confidence_impl.1} parent=0 // pred_check
    _
  $region3: #{_confidence_impl.1} parent=0 // pred_check_branch
    %11 = sbr.rel (0) target = $region5
  $region4: #{_confidence_impl.1} parent=0 // pred_region
    _
  $region5: #{_confidence_impl.1} parent=0 // pred_fallthru
    _
  // Predicated region
  $region6: #{_confidence_impl.1} parent=0 // pred_check
    _
  $region7: #{_confidence_impl.1} parent=0 // pred_check_branch
    %13 = sbr.rel (0) target = $region9
  $region8: #{_confidence_impl.1} parent=0 // pred_region
    _
  $region9: #{_confidence_impl.1} parent=0 // pred_fallthru
    _
  // Predicated region
  $region10: #{_confidence_impl.1} parent=0 // pred_check
    _
  $region11: #{_confidence_impl.1} parent=0 // pred_check_branch
    %15 = sbr.rel (0) target = $region13
  $region12: #{_confidence_impl.1} parent=0 // pred_region
    _
  $region13: #{_confidence_impl.1} parent=0 // pred_fallthru
    _
  // Predicated region
  $region14: #{_confidence_impl.1} parent=0 // pred_check
    _
  $region15: #{_confidence_impl.1} parent=0 // pred_check_branch
    %17 = sbr.rel (0) target = $region17
  $region16: #{_confidence_impl.1} parent=0 // pred_region
    _
  $region17: #{_confidence_impl.1} parent=0 // pred_fallthru
    _
  %v18 = vld [vmem:[%s3] sm:$0xf]
  %v19 = vld [vmem:[%s1] sm:$0xff]
  %v20 = vld [vmem:[%s1 + $0x8] sm:$0xff]
  %v21 = vld [vmem:[%s1 + $0x10] sm:$0xff]
  %v22 = vld [vmem:[%s1 + $0x18] sm:$0xff]
  %v23 = vld [vmem:[%s1 + $0x20] sm:$0xff]
  %v24 = vld [vmem:[%s1 + $0x28] sm:$0xff]
  %v25 = vld [vmem:[%s1 + $0x30] sm:$0xff]
  %v26 = vld [vmem:[%s1 + $0x38] sm:$0xff]
  %v27 = vld [vmem:[%s1 + $0x40] sm:$0xff]
  %v28 = vld [vmem:[%s1 + $0x48] sm:$0xff]
  %v29 = vld [vmem:[%s1 + $0x50] sm:$0xff]
  %v30 = vld [vmem:[%s1 + $0x58] sm:$0xff]
  %v31 = vld [vmem:[%s1 + $0x60] sm:$0xff]
  %v32 = vld [vmem:[%s1 + $0x68] sm:$0xff]
  %v33 = vld [vmem:[%s1 + $0x70] sm:$0xff]
  %v34 = vld [vmem:[%s1 + $0x78] sm:$0xff]
  %v35 = vld [vmem:[%s2] sm:$0xf]
  %36 = vmatprep.subr.mxu0 0.0
  %v37 = vand.u32 %v19, 4294901760
  %38 = vmatpush1.msra.mxu0 %v37
  %39 = vmatprep.subr.mxu0 0.0
  %v40 = vand.u32 %v20, 4294901760
  %41 = vmatpush1.msra.mxu0 %v40
  %42 = vmatprep.subr.mxu0 0.0
  %v43 = vand.u32 %v21, 4294901760
  %44 = vmatpush1.msra.mxu0 %v43
  %45 = vmatprep.subr.mxu0 0.0
  %v46 = vand.u32 %v22, 4294901760
  %47 = vmatpush1.msra.mxu0 %v46
  %48 = vmatprep.subr.mxu0 0.0
  %v49 = vand.u32 %v23, 4294901760
  %50 = vmatpush1.msra.mxu0 %v49
  %51 = vmatprep.subr.mxu0 0.0
  %v52 = vand.u32 %v24, 4294901760
  %53 = vmatpush1.msra.mxu0 %v52
  %54 = vmatprep.subr.mxu0 0.0
  %v55 = vand.u32 %v25, 4294901760
  %56 = vmatpush1.msra.mxu0 %v55
  %57 = vmatprep.subr.mxu0 0.0
  %v58 = vand.u32 %v26, 4294901760
  %59 = vmatpush1.msra.mxu0 %v58
  %60 = vmatprep.subr.mxu0 0.0
  %v61 = vand.u32 %v27, 4294901760
  %62 = vmatpush1.msra.mxu0 %v61
  %63 = vmatprep.subr.mxu0 0.0
  %v64 = vand.u32 %v28, 4294901760
  %65 = vmatpush1.msra.mxu0 %v64
  %66 = vmatprep.subr.mxu0 0.0
  %v67 = vand.u32 %v29, 4294901760
  %68 = vmatpush1.msra.mxu0 %v67
  %69 = vmatprep.subr.mxu0 0.0
  %v70 = vand.u32 %v30, 4294901760
  %71 = vmatpush1.msra.mxu0 %v70
  %72 = vmatprep.subr.mxu0 0.0
  %v73 = vand.u32 %v31, 4294901760
  %74 = vmatpush1.msra.mxu0 %v73
  %75 = vmatprep.subr.mxu0 0.0
  %v76 = vand.u32 %v32, 4294901760
  %77 = vmatpush1.msra.mxu0 %v76
  %78 = vmatprep.subr.mxu0 0.0
  %v79 = vand.u32 %v33, 4294901760
  %80 = vmatpush1.msra.mxu0 %v79
  %81 = vmatprep.subr.mxu0 0.0
  %v82 = vand.u32 %v34, 4294901760
  %83 = vmatpush1.msra.mxu0 %v82
  %84 = vmatprep.subr.mxu0 0.0
  %85 = vmatpush1.msra.mxu0 0.0
  %86 = vmatprep.subr.mxu0 0.0
  %87 = vmatpush1.msra.mxu0 0.0
  %88 = vmatprep.subr.mxu0 0.0
  %89 = vmatpush1.msra.mxu0 0.0
  %90 = vmatprep.subr.mxu0 0.0
  %91 = vmatpush1.msra.mxu0 0.0
  %92 = vmatprep.subr.mxu0 0.0
  %93 = vmatpush1.msra.mxu0 0.0
  %94 = vmatprep.subr.mxu0 0.0
  %95 = vmatpush1.msra.mxu0 0.0
  %96 = vmatprep.subr.mxu0 0.0
  %97 = vmatpush1.msra.mxu0 0.0
  %98 = vmatprep.subr.mxu0 0.0
  %99 = vmatpush1.msra.mxu0 0.0
  %100 = vmatprep.subr.mxu0 0.0
  %101 = vmatpush1.msra.mxu0 0.0
  %102 = vmatprep.subr.mxu0 0.0
  %103 = vmatpush1.msra.mxu0 0.0
  %104 = vmatprep.subr.mxu0 0.0
  %105 = vmatpush1.msra.mxu0 0.0
  %106 = vmatprep.subr.mxu0 0.0
  %107 = vmatpush1.msra.mxu0 0.0
  %108 = vmatprep.subr.mxu0 0.0
  %109 = vmatpush1.msra.mxu0 0.0
  %110 = vmatprep.subr.mxu0 0.0
  %111 = vmatpush1.msra.mxu0 0.0
  %112 = vmatprep.subr.mxu0 0.0
  %113 = vmatpush1.msra.mxu0 0.0
  %114 = vmatprep.subr.mxu0 0.0
  %115 = vmatpush1.msra.mxu0 0.0
  %116 = vmatprep.mubr.f32.mxu0 0.0
  %v117 = vand.u32 %v18, 4294901760
  %v118 = vsub.f32 %v18, %v117
  %v119 = vand.u32 %v118, 4294901760
  %v120 = vsub.f32 %v118, %v119
  %v121 = vand.u32 %v120, 4294901760
  %122 = vmatmul.mubr.f32.gmra.mrb[0].mxu0 %v121
  %v123 = vpop.f32.mrb[0].mxu0
  %v124 = vadd.f32 0.0, %v123
  %v125 = vpop.f32.mrb[0].mxu0
  %126 = vdwg.mxu0
  %127 = vmatprep.subr.mxu0 0.0
  %v128 = vand.u32 %v19, 4294901760
  %v129 = vsub.f32 %v19, %v128
  %v130 = vand.u32 %v129, 4294901760
  %v131 = vsub.f32 %v129, %v130
  %v132 = vand.u32 %v131, 4294901760
  %133 = vmatpush1.msra.mxu0 %v132
  %134 = vmatprep.subr.mxu0 0.0
  %v135 = vand.u32 %v20, 4294901760
  %v136 = vsub.f32 %v20, %v135
  %v137 = vand.u32 %v136, 4294901760
  %v138 = vsub.f32 %v136, %v137
  %v139 = vand.u32 %v138, 4294901760
  %140 = vmatpush1.msra.mxu0 %v139
  %141 = vmatprep.subr.mxu0 0.0
  %v142 = vand.u32 %v21, 4294901760
  %v143 = vsub.f32 %v21, %v142
  %v144 = vand.u32 %v143, 4294901760
  %v145 = vsub.f32 %v143, %v144
  %v146 = vand.u32 %v145, 4294901760
  %147 = vmatpush1.msra.mxu0 %v146
  %148 = vmatprep.subr.mxu0 0.0
  %v149 = vand.u32 %v22, 4294901760
  %v150 = vsub.f32 %v22, %v149
  %v151 = vand.u32 %v150, 4294901760
  %v152 = vsub.f32 %v150, %v151
  %v153 = vand.u32 %v152, 4294901760
  %154 = vmatpush1.msra.mxu0 %v153
  %155 = vmatprep.subr.mxu0 0.0
  %v156 = vand.u32 %v23, 4294901760
  %v157 = vsub.f32 %v23, %v156
  %v158 = vand.u32 %v157, 4294901760
  %v159 = vsub.f32 %v157, %v158
  %v160 = vand.u32 %v159, 4294901760
  %161 = vmatpush1.msra.mxu0 %v160
  %162 = vmatprep.subr.mxu0 0.0
  %v163 = vand.u32 %v24, 4294901760
  %v164 = vsub.f32 %v24, %v163
  %v165 = vand.u32 %v164, 4294901760
  %v166 = vsub.f32 %v164, %v165
  %v167 = vand.u32 %v166, 4294901760
  %168 = vmatpush1.msra.mxu0 %v167
  %169 = vmatprep.subr.mxu0 0.0
  %v170 = vand.u32 %v25, 4294901760
  %v171 = vsub.f32 %v25, %v170
  %v172 = vand.u32 %v171, 4294901760
  %v173 = vsub.f32 %v171, %v172
  %v174 = vand.u32 %v173, 4294901760
  %175 = vmatpush1.msra.mxu0 %v174
  %176 = vmatprep.subr.mxu0 0.0
  %v177 = vand.u32 %v26, 4294901760
  %v178 = vsub.f32 %v26, %v177
  %v179 = vand.u32 %v178, 4294901760
  %v180 = vsub.f32 %v178, %v179
  %v181 = vand.u32 %v180, 4294901760
  %182 = vmatpush1.msra.mxu0 %v181
  %183 = vmatprep.subr.mxu0 0.0
  %v184 = vand.u32 %v27, 4294901760
  %v185 = vsub.f32 %v27, %v184
  %v186 = vand.u32 %v185, 4294901760
  %v187 = vsub.f32 %v185, %v186
  %v188 = vand.u32 %v187, 4294901760
  %189 = vmatpush1.msra.mxu0 %v188
  %190 = vmatprep.subr.mxu0 0.0
  %v191 = vand.u32 %v28, 4294901760
  %v192 = vsub.f32 %v28, %v191
  %v193 = vand.u32 %v192, 4294901760
  %v194 = vsub.f32 %v192, %v193
  %v195 = vand.u32 %v194, 4294901760
  %196 = vmatpush1.msra.mxu0 %v195
  %197 = vmatprep.subr.mxu0 0.0
  %v198 = vand.u32 %v29, 4294901760
  %v199 = vsub.f32 %v29, %v198
  %v200 = vand.u32 %v199, 4294901760
  %v201 = vsub.f32 %v199, %v200
  %v202 = vand.u32 %v201, 4294901760
  %203 = vmatpush1.msra.mxu0 %v202
  %204 = vmatprep.subr.mxu0 0.0
  %v205 = vand.u32 %v30, 4294901760
  %v206 = vsub.f32 %v30, %v205
  %v207 = vand.u32 %v206, 4294901760
  %v208 = vsub.f32 %v206, %v207
  %v209 = vand.u32 %v208, 4294901760
  %210 = vmatpush1.msra.mxu0 %v209
  %211 = vmatprep.subr.mxu0 0.0
  %v212 = vand.u32 %v31, 4294901760
  %v213 = vsub.f32 %v31, %v212
  %v214 = vand.u32 %v213, 4294901760
  %v215 = vsub.f32 %v213, %v214
  %v216 = vand.u32 %v215, 4294901760
  %217 = vmatpush1.msra.mxu0 %v216
  %218 = vmatprep.subr.mxu0 0.0
  %v219 = vand.u32 %v32, 4294901760
  %v220 = vsub.f32 %v32, %v219
  %v221 = vand.u32 %v220, 4294901760
  %v222 = vsub.f32 %v220, %v221
  %v223 = vand.u32 %v222, 4294901760
  %224 = vmatpush1.msra.mxu0 %v223
  %225 = vmatprep.subr.mxu0 0.0
  %v226 = vand.u32 %v33, 4294901760
  %v227 = vsub.f32 %v33, %v226
  %v228 = vand.u32 %v227, 4294901760
  %v229 = vsub.f32 %v227, %v228
  %v230 = vand.u32 %v229, 4294901760
  %231 = vmatpush1.msra.mxu0 %v230
  %232 = vmatprep.subr.mxu0 0.0
  %v233 = vand.u32 %v34, 4294901760
  %v234 = vsub.f32 %v34, %v233
  %v235 = vand.u32 %v234, 4294901760
  %v236 = vsub.f32 %v234, %v235
  %v237 = vand.u32 %v236, 4294901760
  %238 = vmatpush1.msra.mxu0 %v237
  %239 = vmatprep.subr.mxu0 0.0
  %240 = vmatpush1.msra.mxu0 0.0
  %241 = vmatprep.subr.mxu0 0.0
  %242 = vmatpush1.msra.mxu0 0.0
  %243 = vmatprep.subr.mxu0 0.0
  %244 = vmatpush1.msra.mxu0 0.0
  %245 = vmatprep.subr.mxu0 0.0
  %246 = vmatpush1.msra.mxu0 0.0
  %247 = vmatprep.subr.mxu0 0.0
  %248 = vmatpush1.msra.mxu0 0.0
  %249 = vmatprep.subr.mxu0 0.0
  %250 = vmatpush1.msra.mxu0 0.0
  %251 = vmatprep.subr.mxu0 0.0
  %252 = vmatpush1.msra.mxu0 0.0
  %253 = vmatprep.subr.mxu0 0.0
  %254 = vmatpush1.msra.mxu0 0.0
  %255 = vmatprep.subr.mxu0 0.0
  %256 = vmatpush1.msra.mxu0 0.0
  %257 = vmatprep.subr.mxu0 0.0
  %258 = vmatpush1.msra.mxu0 0.0
  %259 = vmatprep.subr.mxu0 0.0
  %260 = vmatpush1.msra.mxu0 0.0
  %261 = vmatprep.subr.mxu0 0.0
  %262 = vmatpush1.msra.mxu0 0.0
  %263 = vmatprep.subr.mxu0 0.0
  %264 = vmatpush1.msra.mxu0 0.0
  %265 = vmatprep.subr.mxu0 0.0
  %266 = vmatpush1.msra.mxu0 0.0
  %267 = vmatprep.subr.mxu0 0.0
  %268 = vmatpush1.msra.mxu0 0.0
  %269 = vmatprep.subr.mxu0 0.0
  %270 = vmatpush1.msra.mxu0 0.0
  %271 = vmatprep.mubr.f32.mxu0 0.0
  %v272 = vand.u32 %v18, 4294901760
  %273 = vmatmul.mubr.f32.gmra.mrb[0].mxu0 %v272
  %v274 = vpop.f32.mrb[0].mxu0
  %v275 = vadd.f32 %v124, %v274
  %v276 = vpop.f32.mrb[0].mxu0
  %277 = vdwg.mxu0
  %278 = vmatprep.subr.mxu0 0.0
  %v279 = vand.u32 %v19, 4294901760
  %v280 = vsub.f32 %v19, %v279
  %281 = vmatpush1.msra.mxu0 %v280
  %282 = vmatprep.subr.mxu0 0.0
  %v283 = vand.u32 %v20, 4294901760
  %v284 = vsub.f32 %v20, %v283
  %285 = vmatpush1.msra.mxu0 %v284
  %286 = vmatprep.subr.mxu0 0.0
  %v287 = vand.u32 %v21, 4294901760
  %v288 = vsub.f32 %v21, %v287
  %289 = vmatpush1.msra.mxu0 %v288
  %290 = vmatprep.subr.mxu0 0.0
  %v291 = vand.u32 %v22, 4294901760
  %v292 = vsub.f32 %v22, %v291
  %293 = vmatpush1.msra.mxu0 %v292
  %294 = vmatprep.subr.mxu0 0.0
  %v295 = vand.u32 %v23, 4294901760
  %v296 = vsub.f32 %v23, %v295
  %297 = vmatpush1.msra.mxu0 %v296
  %298 = vmatprep.subr.mxu0 0.0
  %v299 = vand.u32 %v24, 4294901760
  %v300 = vsub.f32 %v24, %v299
  %301 = vmatpush1.msra.mxu0 %v300
  %302 = vmatprep.subr.mxu0 0.0
  %v303 = vand.u32 %v25, 4294901760
  %v304 = vsub.f32 %v25, %v303
  %305 = vmatpush1.msra.mxu0 %v304
  %306 = vmatprep.subr.mxu0 0.0
  %v307 = vand.u32 %v26, 4294901760
  %v308 = vsub.f32 %v26, %v307
  %309 = vmatpush1.msra.mxu0 %v308
  %310 = vmatprep.subr.mxu0 0.0
  %v311 = vand.u32 %v27, 4294901760
  %v312 = vsub.f32 %v27, %v311
  %313 = vmatpush1.msra.mxu0 %v312
  %314 = vmatprep.subr.mxu0 0.0
  %v315 = vand.u32 %v28, 4294901760
  %v316 = vsub.f32 %v28, %v315
  %317 = vmatpush1.msra.mxu0 %v316
  %318 = vmatprep.subr.mxu0 0.0
  %v319 = vand.u32 %v29, 4294901760
  %v320 = vsub.f32 %v29, %v319
  %321 = vmatpush1.msra.mxu0 %v320
  %322 = vmatprep.subr.mxu0 0.0
  %v323 = vand.u32 %v30, 4294901760
  %v324 = vsub.f32 %v30, %v323
  %325 = vmatpush1.msra.mxu0 %v324
  %326 = vmatprep.subr.mxu0 0.0
  %v327 = vand.u32 %v31, 4294901760
  %v328 = vsub.f32 %v31, %v327
  %329 = vmatpush1.msra.mxu0 %v328
  %330 = vmatprep.subr.mxu0 0.0
  %v331 = vand.u32 %v32, 4294901760
  %v332 = vsub.f32 %v32, %v331
  %333 = vmatpush1.msra.mxu0 %v332
  %334 = vmatprep.subr.mxu0 0.0
  %v335 = vand.u32 %v33, 4294901760
  %v336 = vsub.f32 %v33, %v335
  %337 = vmatpush1.msra.mxu0 %v336
  %338 = vmatprep.subr.mxu0 0.0
  %v339 = vand.u32 %v34, 4294901760
  %v340 = vsub.f32 %v34, %v339
  %341 = vmatpush1.msra.mxu0 %v340
  %342 = vmatprep.subr.mxu0 0.0
  %343 = vmatpush1.msra.mxu0 0.0
  %344 = vmatprep.subr.mxu0 0.0
  %345 = vmatpush1.msra.mxu0 0.0
  %346 = vmatprep.subr.mxu0 0.0
  %347 = vmatpush1.msra.mxu0 0.0
  %348 = vmatprep.subr.mxu0 0.0
  %349 = vmatpush1.msra.mxu0 0.0
  %350 = vmatprep.subr.mxu0 0.0
  %351 = vmatpush1.msra.mxu0 0.0
  %352 = vmatprep.subr.mxu0 0.0
  %353 = vmatpush1.msra.mxu0 0.0
  %354 = vmatprep.subr.mxu0 0.0
  %355 = vmatpush1.msra.mxu0 0.0
  %356 = vmatprep.subr.mxu0 0.0
  %357 = vmatpush1.msra.mxu0 0.0
  %358 = vmatprep.subr.mxu0 0.0
  %359 = vmatpush1.msra.mxu0 0.0
  %360 = vmatprep.subr.mxu0 0.0
  %361 = vmatpush1.msra.mxu0 0.0
  %362 = vmatprep.subr.mxu0 0.0
  %363 = vmatpush1.msra.mxu0 0.0
  %364 = vmatprep.subr.mxu0 0.0
  %365 = vmatpush1.msra.mxu0 0.0
  %366 = vmatprep.subr.mxu0 0.0
  %367 = vmatpush1.msra.mxu0 0.0
  %368 = vmatprep.subr.mxu0 0.0
  %369 = vmatpush1.msra.mxu0 0.0
  %370 = vmatprep.subr.mxu0 0.0
  %371 = vmatpush1.msra.mxu0 0.0
  %372 = vmatprep.subr.mxu0 0.0
  %373 = vmatpush1.msra.mxu0 0.0
  %374 = vmatprep.mubr.f32.mxu0 0.0
  %v375 = vand.u32 %v18, 4294901760
  %v376 = vsub.f32 %v18, %v375
  %377 = vmatmul.mubr.f32.gmra.mrb[0].mxu0 %v376
  %v378 = vpop.f32.mrb[0].mxu0
  %v379 = vadd.f32 %v275, %v378
  %v380 = vpop.f32.mrb[0].mxu0
  %381 = vdwg.mxu0
  %382 = vmatprep.subr.mxu0 0.0
  %v383 = vand.u32 %v19, 4294901760
  %384 = vmatpush1.msra.mxu0 %v383
  %385 = vmatprep.subr.mxu0 0.0
  %v386 = vand.u32 %v20, 4294901760
  %387 = vmatpush1.msra.mxu0 %v386
  %388 = vmatprep.subr.mxu0 0.0
  %v389 = vand.u32 %v21, 4294901760
  %390 = vmatpush1.msra.mxu0 %v389
  %391 = vmatprep.subr.mxu0 0.0
  %v392 = vand.u32 %v22, 4294901760
  %393 = vmatpush1.msra.mxu0 %v392
  %394 = vmatprep.subr.mxu0 0.0
  %v395 = vand.u32 %v23, 4294901760
  %396 = vmatpush1.msra.mxu0 %v395
  %397 = vmatprep.subr.mxu0 0.0
  %v398 = vand.u32 %v24, 4294901760
  %399 = vmatpush1.msra.mxu0 %v398
  %400 = vmatprep.subr.mxu0 0.0
  %v401 = vand.u32 %v25, 4294901760
  %402 = vmatpush1.msra.mxu0 %v401
  %403 = vmatprep.subr.mxu0 0.0
  %v404 = vand.u32 %v26, 4294901760
  %405 = vmatpush1.msra.mxu0 %v404
  %406 = vmatprep.subr.mxu0 0.0
  %v407 = vand.u32 %v27, 4294901760
  %408 = vmatpush1.msra.mxu0 %v407
  %409 = vmatprep.subr.mxu0 0.0
  %v410 = vand.u32 %v28, 4294901760
  %411 = vmatpush1.msra.mxu0 %v410
  %412 = vmatprep.subr.mxu0 0.0
  %v413 = vand.u32 %v29, 4294901760
  %414 = vmatpush1.msra.mxu0 %v413
  %415 = vmatprep.subr.mxu0 0.0
  %v416 = vand.u32 %v30, 4294901760
  %417 = vmatpush1.msra.mxu0 %v416
  %418 = vmatprep.subr.mxu0 0.0
  %v419 = vand.u32 %v31, 4294901760
  %420 = vmatpush1.msra.mxu0 %v419
  %421 = vmatprep.subr.mxu0 0.0
  %v422 = vand.u32 %v32, 4294901760
  %423 = vmatpush1.msra.mxu0 %v422
  %424 = vmatprep.subr.mxu0 0.0
  %v425 = vand.u32 %v33, 4294901760
  %426 = vmatpush1.msra.mxu0 %v425
  %427 = vmatprep.subr.mxu0 0.0
  %v428 = vand.u32 %v34, 4294901760
  %429 = vmatpush1.msra.mxu0 %v428
  %430 = vmatprep.subr.mxu0 0.0
  %431 = vmatpush1.msra.mxu0 0.0
  %432 = vmatprep.subr.mxu0 0.0
  %433 = vmatpush1.msra.mxu0 0.0
  %434 = vmatprep.subr.mxu0 0.0
  %435 = vmatpush1.msra.mxu0 0.0
  %436 = vmatprep.subr.mxu0 0.0
  %437 = vmatpush1.msra.mxu0 0.0
  %438 = vmatprep.subr.mxu0 0.0
  %439 = vmatpush1.msra.mxu0 0.0
  %440 = vmatprep.subr.mxu0 0.0
  %441 = vmatpush1.msra.mxu0 0.0
  %442 = vmatprep.subr.mxu0 0.0
  %443 = vmatpush1.msra.mxu0 0.0
  %444 = vmatprep.subr.mxu0 0.0
  %445 = vmatpush1.msra.mxu0 0.0
  %446 = vmatprep.subr.mxu0 0.0
  %447 = vmatpush1.msra.mxu0 0.0
  %448 = vmatprep.subr.mxu0 0.0
  %449 = vmatpush1.msra.mxu0 0.0
  %450 = vmatprep.subr.mxu0 0.0
  %451 = vmatpush1.msra.mxu0 0.0
  %452 = vmatprep.subr.mxu0 0.0
  %453 = vmatpush1.msra.mxu0 0.0
  %454 = vmatprep.subr.mxu0 0.0
  %455 = vmatpush1.msra.mxu0 0.0
  %456 = vmatprep.subr.mxu0 0.0
  %457 = vmatpush1.msra.mxu0 0.0
  %458 = vmatprep.subr.mxu0 0.0
  %459 = vmatpush1.msra.mxu0 0.0
  %460 = vmatprep.subr.mxu0 0.0
  %461 = vmatpush1.msra.mxu0 0.0
  %462 = vmatprep.mubr.f32.mxu0 0.0
  %v463 = vand.u32 %v18, 4294901760
  %v464 = vsub.f32 %v18, %v463
  %v465 = vand.u32 %v464, 4294901760
  %466 = vmatmul.mubr.f32.gmra.mrb[0].mxu0 %v465
  %v467 = vpop.f32.mrb[0].mxu0
  %v468 = vadd.f32 %v379, %v467
  %v469 = vpop.f32.mrb[0].mxu0
  %470 = vdwg.mxu0
  %471 = vmatprep.subr.mxu0 0.0
  %v472 = vand.u32 %v19, 4294901760
  %v473 = vsub.f32 %v19, %v472
  %v474 = vand.u32 %v473, 4294901760
  %475 = vmatpush1.msra.mxu0 %v474
  %476 = vmatprep.subr.mxu0 0.0
  %v477 = vand.u32 %v20, 4294901760
  %v478 = vsub.f32 %v20, %v477
  %v479 = vand.u32 %v478, 4294901760
  %480 = vmatpush1.msra.mxu0 %v479
  %481 = vmatprep.subr.mxu0 0.0
  %v482 = vand.u32 %v21, 4294901760
  %v483 = vsub.f32 %v21, %v482
  %v484 = vand.u32 %v483, 4294901760
  %485 = vmatpush1.msra.mxu0 %v484
  %486 = vmatprep.subr.mxu0 0.0
  %v487 = vand.u32 %v22, 4294901760
  %v488 = vsub.f32 %v22, %v487
  %v489 = vand.u32 %v488, 4294901760
  %490 = vmatpush1.msra.mxu0 %v489
  %491 = vmatprep.subr.mxu0 0.0
  %v492 = vand.u32 %v23, 4294901760
  %v493 = vsub.f32 %v23, %v492
  %v494 = vand.u32 %v493, 4294901760
  %495 = vmatpush1.msra.mxu0 %v494
  %496 = vmatprep.subr.mxu0 0.0
  %v497 = vand.u32 %v24, 4294901760
  %v498 = vsub.f32 %v24, %v497
  %v499 = vand.u32 %v498, 4294901760
  %500 = vmatpush1.msra.mxu0 %v499
  %501 = vmatprep.subr.mxu0 0.0
  %v502 = vand.u32 %v25, 4294901760
  %v503 = vsub.f32 %v25, %v502
  %v504 = vand.u32 %v503, 4294901760
  %505 = vmatpush1.msra.mxu0 %v504
  %506 = vmatprep.subr.mxu0 0.0
  %v507 = vand.u32 %v26, 4294901760
  %v508 = vsub.f32 %v26, %v507
  %v509 = vand.u32 %v508, 4294901760
  %510 = vmatpush1.msra.mxu0 %v509
  %511 = vmatprep.subr.mxu0 0.0
  %v512 = vand.u32 %v27, 4294901760
  %v513 = vsub.f32 %v27, %v512
  %v514 = vand.u32 %v513, 4294901760
  %515 = vmatpush1.msra.mxu0 %v514
  %516 = vmatprep.subr.mxu0 0.0
  %v517 = vand.u32 %v28, 4294901760
  %v518 = vsub.f32 %v28, %v517
  %v519 = vand.u32 %v518, 4294901760
  %520 = vmatpush1.msra.mxu0 %v519
  %521 = vmatprep.subr.mxu0 0.0
  %v522 = vand.u32 %v29, 4294901760
  %v523 = vsub.f32 %v29, %v522
  %v524 = vand.u32 %v523, 4294901760
  %525 = vmatpush1.msra.mxu0 %v524
  %526 = vmatprep.subr.mxu0 0.0
  %v527 = vand.u32 %v30, 4294901760
  %v528 = vsub.f32 %v30, %v527
  %v529 = vand.u32 %v528, 4294901760
  %530 = vmatpush1.msra.mxu0 %v529
  %531 = vmatprep.subr.mxu0 0.0
  %v532 = vand.u32 %v31, 4294901760
  %v533 = vsub.f32 %v31, %v532
  %v534 = vand.u32 %v533, 4294901760
  %535 = vmatpush1.msra.mxu0 %v534
  %536 = vmatprep.subr.mxu0 0.0
  %v537 = vand.u32 %v32, 4294901760
  %v538 = vsub.f32 %v32, %v537
  %v539 = vand.u32 %v538, 4294901760
  %540 = vmatpush1.msra.mxu0 %v539
  %541 = vmatprep.subr.mxu0 0.0
  %v542 = vand.u32 %v33, 4294901760
  %v543 = vsub.f32 %v33, %v542
  %v544 = vand.u32 %v543, 4294901760
  %545 = vmatpush1.msra.mxu0 %v544
  %546 = vmatprep.subr.mxu0 0.0
  %v547 = vand.u32 %v34, 4294901760
  %v548 = vsub.f32 %v34, %v547
  %v549 = vand.u32 %v548, 4294901760
  %550 = vmatpush1.msra.mxu0 %v549
  %551 = vmatprep.subr.mxu0 0.0
  %552 = vmatpush1.msra.mxu0 0.0
  %553 = vmatprep.subr.mxu0 0.0
  %554 = vmatpush1.msra.mxu0 0.0
  %555 = vmatprep.subr.mxu0 0.0
  %556 = vmatpush1.msra.mxu0 0.0
  %557 = vmatprep.subr.mxu0 0.0
  %558 = vmatpush1.msra.mxu0 0.0
  %559 = vmatprep.subr.mxu0 0.0
  %560 = vmatpush1.msra.mxu0 0.0
  %561 = vmatprep.subr.mxu0 0.0
  %562 = vmatpush1.msra.mxu0 0.0
  %563 = vmatprep.subr.mxu0 0.0
  %564 = vmatpush1.msra.mxu0 0.0
  %565 = vmatprep.subr.mxu0 0.0
  %566 = vmatpush1.msra.mxu0 0.0
  %567 = vmatprep.subr.mxu0 0.0
  %568 = vmatpush1.msra.mxu0 0.0
  %569 = vmatprep.subr.mxu0 0.0
  %570 = vmatpush1.msra.mxu0 0.0
  %571 = vmatprep.subr.mxu0 0.0
  %572 = vmatpush1.msra.mxu0 0.0
  %573 = vmatprep.subr.mxu0 0.0
  %574 = vmatpush1.msra.mxu0 0.0
  %575 = vmatprep.subr.mxu0 0.0
  %576 = vmatpush1.msra.mxu0 0.0
  %577 = vmatprep.subr.mxu0 0.0
  %578 = vmatpush1.msra.mxu0 0.0
  %579 = vmatprep.subr.mxu0 0.0
  %580 = vmatpush1.msra.mxu0 0.0
  %581 = vmatprep.subr.mxu0 0.0
  %582 = vmatpush1.msra.mxu0 0.0
  %583 = vmatprep.mubr.f32.mxu0 0.0
  %v584 = vand.u32 %v18, 4294901760
  %585 = vmatmul.mubr.f32.gmra.mrb[0].mxu0 %v584
  %v586 = vpop.f32.mrb[0].mxu0
  %v587 = vadd.f32 %v468, %v586
  %v588 = vpop.f32.mrb[0].mxu0
  %589 = vdwg.mxu0
  %590 = vmatprep.subr.mxu0 0.0
  %v591 = vand.u32 %v19, 4294901760
  %592 = vmatpush1.msra.mxu0 %v591
  %593 = vmatprep.subr.mxu0 0.0
  %v594 = vand.u32 %v20, 4294901760
  %595 = vmatpush1.msra.mxu0 %v594
  %596 = vmatprep.subr.mxu0 0.0
  %v597 = vand.u32 %v21, 4294901760
  %598 = vmatpush1.msra.mxu0 %v597
  %599 = vmatprep.subr.mxu0 0.0
  %v600 = vand.u32 %v22, 4294901760
  %601 = vmatpush1.msra.mxu0 %v600
  %602 = vmatprep.subr.mxu0 0.0
  %v603 = vand.u32 %v23, 4294901760
  %604 = vmatpush1.msra.mxu0 %v603
  %605 = vmatprep.subr.mxu0 0.0
  %v606 = vand.u32 %v24, 4294901760
  %607 = vmatpush1.msra.mxu0 %v606
  %608 = vmatprep.subr.mxu0 0.0
  %v609 = vand.u32 %v25, 4294901760
  %610 = vmatpush1.msra.mxu0 %v609
  %611 = vmatprep.subr.mxu0 0.0
  %v612 = vand.u32 %v26, 4294901760
  %613 = vmatpush1.msra.mxu0 %v612
  %614 = vmatprep.subr.mxu0 0.0
  %v615 = vand.u32 %v27, 4294901760
  %616 = vmatpush1.msra.mxu0 %v615
  %617 = vmatprep.subr.mxu0 0.0
  %v618 = vand.u32 %v28, 4294901760
  %619 = vmatpush1.msra.mxu0 %v618
  %620 = vmatprep.subr.mxu0 0.0
  %v621 = vand.u32 %v29, 4294901760
  %622 = vmatpush1.msra.mxu0 %v621
  %623 = vmatprep.subr.mxu0 0.0
  %v624 = vand.u32 %v30, 4294901760
  %625 = vmatpush1.msra.mxu0 %v624
  %626 = vmatprep.subr.mxu0 0.0
  %v627 = vand.u32 %v31, 4294901760
  %628 = vmatpush1.msra.mxu0 %v627
  %629 = vmatprep.subr.mxu0 0.0
  %v630 = vand.u32 %v32, 4294901760
  %631 = vmatpush1.msra.mxu0 %v630
  %632 = vmatprep.subr.mxu0 0.0
  %v633 = vand.u32 %v33, 4294901760
  %634 = vmatpush1.msra.mxu0 %v633
  %635 = vmatprep.subr.mxu0 0.0
  %v636 = vand.u32 %v34, 4294901760
  %637 = vmatpush1.msra.mxu0 %v636
  %638 = vmatprep.subr.mxu0 0.0
  %639 = vmatpush1.msra.mxu0 0.0
  %640 = vmatprep.subr.mxu0 0.0
  %641 = vmatpush1.msra.mxu0 0.0
  %642 = vmatprep.subr.mxu0 0.0
  %643 = vmatpush1.msra.mxu0 0.0
  %644 = vmatprep.subr.mxu0 0.0
  %645 = vmatpush1.msra.mxu0 0.0
  %646 = vmatprep.subr.mxu0 0.0
  %647 = vmatpush1.msra.mxu0 0.0
  %648 = vmatprep.subr.mxu0 0.0
  %649 = vmatpush1.msra.mxu0 0.0
  %650 = vmatprep.subr.mxu0 0.0
  %651 = vmatpush1.msra.mxu0 0.0
  %652 = vmatprep.subr.mxu0 0.0
  %653 = vmatpush1.msra.mxu0 0.0
  %654 = vmatprep.subr.mxu0 0.0
  %655 = vmatpush1.msra.mxu0 0.0
  %656 = vmatprep.subr.mxu0 0.0
  %657 = vmatpush1.msra.mxu0 0.0
  %658 = vmatprep.subr.mxu0 0.0
  %659 = vmatpush1.msra.mxu0 0.0
  %660 = vmatprep.subr.mxu0 0.0
  %661 = vmatpush1.msra.mxu0 0.0
  %662 = vmatprep.subr.mxu0 0.0
  %663 = vmatpush1.msra.mxu0 0.0
  %664 = vmatprep.subr.mxu0 0.0
  %665 = vmatpush1.msra.mxu0 0.0
  %666 = vmatprep.subr.mxu0 0.0
  %667 = vmatpush1.msra.mxu0 0.0
  %668 = vmatprep.subr.mxu0 0.0
  %669 = vmatpush1.msra.mxu0 0.0
  %670 = vmatprep.mubr.f32.mxu0 0.0
  %v671 = vand.u32 %v18, 4294901760
  %672 = vmatmul.mubr.f32.gmra.mrb[0].mxu0 %v671
  %v673 = vpop.f32.mrb[0].mxu0
  %v674 = vadd.f32 %v587, %v673
  %v675 = vpop.f32.mrb[0].mxu0
  %676 = vdwg.mxu0
  %v677 = vmul.f32 %v674, 0.03125
  %vm678 = vcmask 31744
  %v680 = vsel %vm678, %v677, 0
  %vm682 = vcmask 1043456
  %v684 = vsel %vm682, %v35, 0
  %686 = vmatprep.subr.mxu0 0.0
  %v687 = vand.u32 %v684, 4294901760
  %688 = vmatpush1.msra.mxu0 %v687
  %689 = vmatprep.subr.mxu0 0.0
  %690 = vmatpush1.msra.mxu0 0.0
  %691 = vmatprep.subr.mxu0 0.0
  %692 = vmatpush1.msra.mxu0 0.0
  %693 = vmatprep.subr.mxu0 0.0
  %694 = vmatpush1.msra.mxu0 0.0
  %695 = vmatprep.subr.mxu0 0.0
  %696 = vmatpush1.msra.mxu0 0.0
  %697 = vmatprep.subr.mxu0 0.0
  %698 = vmatpush1.msra.mxu0 0.0
  %699 = vmatprep.subr.mxu0 0.0
  %700 = vmatpush1.msra.mxu0 0.0
  %701 = vmatprep.subr.mxu0 0.0
  %702 = vmatpush1.msra.mxu0 0.0
  %703 = vmatprep.subr.mxu0 0.0
  %704 = vmatpush1.msra.mxu0 0.0
  %705 = vmatprep.subr.mxu0 0.0
  %706 = vmatpush1.msra.mxu0 0.0
  %707 = vmatprep.subr.mxu0 0.0
  %708 = vmatpush1.msra.mxu0 0.0
  %709 = vmatprep.subr.mxu0 0.0
  %710 = vmatpush1.msra.mxu0 0.0
  %711 = vmatprep.subr.mxu0 0.0
  %712 = vmatpush1.msra.mxu0 0.0
  %713 = vmatprep.subr.mxu0 0.0
  %714 = vmatpush1.msra.mxu0 0.0
  %715 = vmatprep.subr.mxu0 0.0
  %716 = vmatpush1.msra.mxu0 0.0
  %717 = vmatprep.subr.mxu0 0.0
  %718 = vmatpush1.msra.mxu0 0.0
  %719 = vmatprep.subr.mxu0 0.0
  %720 = vmatpush1.msra.mxu0 0.0
  %721 = vmatprep.subr.mxu0 0.0
  %722 = vmatpush1.msra.mxu0 0.0
  %723 = vmatprep.subr.mxu0 0.0
  %724 = vmatpush1.msra.mxu0 0.0
  %725 = vmatprep.subr.mxu0 0.0
  %726 = vmatpush1.msra.mxu0 0.0
  %727 = vmatprep.subr.mxu0 0.0
  %728 = vmatpush1.msra.mxu0 0.0
  %729 = vmatprep.subr.mxu0 0.0
  %730 = vmatpush1.msra.mxu0 0.0
  %731 = vmatprep.subr.mxu0 0.0
  %732 = vmatpush1.msra.mxu0 0.0
  %733 = vmatprep.subr.mxu0 0.0
  %734 = vmatpush1.msra.mxu0 0.0
  %735 = vmatprep.subr.mxu0 0.0
  %736 = vmatpush1.msra.mxu0 0.0
  %737 = vmatprep.subr.mxu0 0.0
  %738 = vmatpush1.msra.mxu0 0.0
  %739 = vmatprep.subr.mxu0 0.0
  %740 = vmatpush1.msra.mxu0 0.0
  %741 = vmatprep.subr.mxu0 0.0
  %742 = vmatpush1.msra.mxu0 0.0
  %743 = vmatprep.subr.mxu0 0.0
  %744 = vmatpush1.msra.mxu0 0.0
  %745 = vmatprep.subr.mxu0 0.0
  %746 = vmatpush1.msra.mxu0 0.0
  %747 = vmatprep.subr.mxu0 0.0
  %748 = vmatpush1.msra.mxu0 0.0
  %749 = vmatprep.subr.mxu0 0.0
  %750 = vmatpush1.msra.mxu0 0.0
  %751 = vmatprep.mubr.f32.mxu0 0.0
  %v752 = vand.u32 %v680, 4294901760
  %v753 = vsub.f32 %v680, %v752
  %v754 = vand.u32 %v753, 4294901760
  %v755 = vsub.f32 %v753, %v754
  %v756 = vand.u32 %v755, 4294901760
  %757 = vmatmul.mubr.f32.gmra.mrb[0].mxu0 %v756
  %v758 = vpop.f32.mrb[0].mxu0
  %v759 = vadd.f32 0.0, %v758
  %v760 = vpop.f32.mrb[0].mxu0
  %761 = vdwg.mxu0
  %762 = vmatprep.subr.mxu0 0.0
  %v763 = vand.u32 %v684, 4294901760
  %v764 = vsub.f32 %v684, %v763
  %v765 = vand.u32 %v764, 4294901760
  %v766 = vsub.f32 %v764, %v765
  %v767 = vand.u32 %v766, 4294901760
  %768 = vmatpush1.msra.mxu0 %v767
  %769 = vmatprep.subr.mxu0 0.0
  %770 = vmatpush1.msra.mxu0 0.0
  %771 = vmatprep.subr.mxu0 0.0
  %772 = vmatpush1.msra.mxu0 0.0
  %773 = vmatprep.subr.mxu0 0.0
  %774 = vmatpush1.msra.mxu0 0.0
  %775 = vmatprep.subr.mxu0 0.0
  %776 = vmatpush1.msra.mxu0 0.0
  %777 = vmatprep.subr.mxu0 0.0
  %778 = vmatpush1.msra.mxu0 0.0
  %779 = vmatprep.subr.mxu0 0.0
  %780 = vmatpush1.msra.mxu0 0.0
  %781 = vmatprep.subr.mxu0 0.0
  %782 = vmatpush1.msra.mxu0 0.0
  %783 = vmatprep.subr.mxu0 0.0
  %784 = vmatpush1.msra.mxu0 0.0
  %785 = vmatprep.subr.mxu0 0.0
  %786 = vmatpush1.msra.mxu0 0.0
  %787 = vmatprep.subr.mxu0 0.0
  %788 = vmatpush1.msra.mxu0 0.0
  %789 = vmatprep.subr.mxu0 0.0
  %790 = vmatpush1.msra.mxu0 0.0
  %791 = vmatprep.subr.mxu0 0.0
  %792 = vmatpush1.msra.mxu0 0.0
  %793 = vmatprep.subr.mxu0 0.0
  %794 = vmatpush1.msra.mxu0 0.0
  %795 = vmatprep.subr.mxu0 0.0
  %796 = vmatpush1.msra.mxu0 0.0
  %797 = vmatprep.subr.mxu0 0.0
  %798 = vmatpush1.msra.mxu0 0.0
  %799 = vmatprep.subr.mxu0 0.0
  %800 = vmatpush1.msra.mxu0 0.0
  %801 = vmatprep.subr.mxu0 0.0
  %802 = vmatpush1.msra.mxu0 0.0
  %803 = vmatprep.subr.mxu0 0.0
  %804 = vmatpush1.msra.mxu0 0.0
  %805 = vmatprep.subr.mxu0 0.0
  %806 = vmatpush1.msra.mxu0 0.0
  %807 = vmatprep.subr.mxu0 0.0
  %808 = vmatpush1.msra.mxu0 0.0
  %809 = vmatprep.subr.mxu0 0.0
  %810 = vmatpush1.msra.mxu0 0.0
  %811 = vmatprep.subr.mxu0 0.0
  %812 = vmatpush1.msra.mxu0 0.0
  %813 = vmatprep.subr.mxu0 0.0
  %814 = vmatpush1.msra.mxu0 0.0
  %815 = vmatprep.subr.mxu0 0.0
  %816 = vmatpush1.msra.mxu0 0.0
  %817 = vmatprep.subr.mxu0 0.0
  %818 = vmatpush1.msra.mxu0 0.0
  %819 = vmatprep.subr.mxu0 0.0
  %820 = vmatpush1.msra.mxu0 0.0
  %821 = vmatprep.subr.mxu0 0.0
  %822 = vmatpush1.msra.mxu0 0.0
  %823 = vmatprep.subr.mxu0 0.0
  %824 = vmatpush1.msra.mxu0 0.0
  %825 = vmatprep.subr.mxu0 0.0
  %826 = vmatpush1.msra.mxu0 0.0
  %827 = vmatprep.subr.mxu0 0.0
  %828 = vmatpush1.msra.mxu0 0.0
  %829 = vmatprep.subr.mxu0 0.0
  %830 = vmatpush1.msra.mxu0 0.0
  %831 = vmatprep.mubr.f32.mxu0 0.0
  %v832 = vand.u32 %v680, 4294901760
  %833 = vmatmul.mubr.f32.gmra.mrb[0].mxu0 %v832
  %v834 = vpop.f32.mrb[0].mxu0
  %v835 = vadd.f32 %v759, %v834
  %v836 = vpop.f32.mrb[0].mxu0
  %837 = vdwg.mxu0
  %838 = vmatprep.subr.mxu0 0.0
  %v839 = vand.u32 %v684, 4294901760
  %v840 = vsub.f32 %v684, %v839
  %841 = vmatpush1.msra.mxu0 %v840
  %842 = vmatprep.subr.mxu0 0.0
  %843 = vmatpush1.msra.mxu0 0.0
  %844 = vmatprep.subr.mxu0 0.0
  %845 = vmatpush1.msra.mxu0 0.0
  %846 = vmatprep.subr.mxu0 0.0
  %847 = vmatpush1.msra.mxu0 0.0
  %848 = vmatprep.subr.mxu0 0.0
  %849 = vmatpush1.msra.mxu0 0.0
  %850 = vmatprep.subr.mxu0 0.0
  %851 = vmatpush1.msra.mxu0 0.0
  %852 = vmatprep.subr.mxu0 0.0
  %853 = vmatpush1.msra.mxu0 0.0
  %854 = vmatprep.subr.mxu0 0.0
  %855 = vmatpush1.msra.mxu0 0.0
  %856 = vmatprep.subr.mxu0 0.0
  %857 = vmatpush1.msra.mxu0 0.0
  %858 = vmatprep.subr.mxu0 0.0
  %859 = vmatpush1.msra.mxu0 0.0
  %860 = vmatprep.subr.mxu0 0.0
  %861 = vmatpush1.msra.mxu0 0.0
  %862 = vmatprep.subr.mxu0 0.0
  %863 = vmatpush1.msra.mxu0 0.0
  %864 = vmatprep.subr.mxu0 0.0
  %865 = vmatpush1.msra.mxu0 0.0
  %866 = vmatprep.subr.mxu0 0.0
  %867 = vmatpush1.msra.mxu0 0.0
  %868 = vmatprep.subr.mxu0 0.0
  %869 = vmatpush1.msra.mxu0 0.0
  %870 = vmatprep.subr.mxu0 0.0
  %871 = vmatpush1.msra.mxu0 0.0
  %872 = vmatprep.subr.mxu0 0.0
  %873 = vmatpush1.msra.mxu0 0.0
  %874 = vmatprep.subr.mxu0 0.0
  %875 = vmatpush1.msra.mxu0 0.0
  %876 = vmatprep.subr.mxu0 0.0
  %877 = vmatpush1.msra.mxu0 0.0
  %878 = vmatprep.subr.mxu0 0.0
  %879 = vmatpush1.msra.mxu0 0.0
  %880 = vmatprep.subr.mxu0 0.0
  %881 = vmatpush1.msra.mxu0 0.0
  %882 = vmatprep.subr.mxu0 0.0
  %883 = vmatpush1.msra.mxu0 0.0
  %884 = vmatprep.subr.mxu0 0.0
  %885 = vmatpush1.msra.mxu0 0.0
  %886 = vmatprep.subr.mxu0 0.0
  %887 = vmatpush1.msra.mxu0 0.0
  %888 = vmatprep.subr.mxu0 0.0
  %889 = vmatpush1.msra.mxu0 0.0
  %890 = vmatprep.subr.mxu0 0.0
  %891 = vmatpush1.msra.mxu0 0.0
  %892 = vmatprep.subr.mxu0 0.0
  %893 = vmatpush1.msra.mxu0 0.0
  %894 = vmatprep.subr.mxu0 0.0
  %895 = vmatpush1.msra.mxu0 0.0
  %896 = vmatprep.subr.mxu0 0.0
  %897 = vmatpush1.msra.mxu0 0.0
  %898 = vmatprep.subr.mxu0 0.0
  %899 = vmatpush1.msra.mxu0 0.0
  %900 = vmatprep.subr.mxu0 0.0
  %901 = vmatpush1.msra.mxu0 0.0
  %902 = vmatprep.subr.mxu0 0.0
  %903 = vmatpush1.msra.mxu0 0.0
  %904 = vmatprep.mubr.f32.mxu0 0.0
  %v905 = vand.u32 %v680, 4294901760
  %v906 = vsub.f32 %v680, %v905
  %907 = vmatmul.mubr.f32.gmra.mrb[0].mxu0 %v906
  %v908 = vpop.f32.mrb[0].mxu0
  %v909 = vadd.f32 %v835, %v908
  %v910 = vpop.f32.mrb[0].mxu0
  %911 = vdwg.mxu0
  %912 = vmatprep.subr.mxu0 0.0
  %v913 = vand.u32 %v684, 4294901760
  %914 = vmatpush1.msra.mxu0 %v913
  %915 = vmatprep.subr.mxu0 0.0
  %916 = vmatpush1.msra.mxu0 0.0
  %917 = vmatprep.subr.mxu0 0.0
  %918 = vmatpush1.msra.mxu0 0.0
  %919 = vmatprep.subr.mxu0 0.0
  %920 = vmatpush1.msra.mxu0 0.0
  %921 = vmatprep.subr.mxu0 0.0
  %922 = vmatpush1.msra.mxu0 0.0
  %923 = vmatprep.subr.mxu0 0.0
  %924 = vmatpush1.msra.mxu0 0.0
  %925 = vmatprep.subr.mxu0 0.0
  %926 = vmatpush1.msra.mxu0 0.0
  %927 = vmatprep.subr.mxu0 0.0
  %928 = vmatpush1.msra.mxu0 0.0
  %929 = vmatprep.subr.mxu0 0.0
  %930 = vmatpush1.msra.mxu0 0.0
  %931 = vmatprep.subr.mxu0 0.0
  %932 = vmatpush1.msra.mxu0 0.0
  %933 = vmatprep.subr.mxu0 0.0
  %934 = vmatpush1.msra.mxu0 0.0
  %935 = vmatprep.subr.mxu0 0.0
  %936 = vmatpush1.msra.mxu0 0.0
  %937 = vmatprep.subr.mxu0 0.0
  %938 = vmatpush1.msra.mxu0 0.0
  %939 = vmatprep.subr.mxu0 0.0
  %940 = vmatpush1.msra.mxu0 0.0
  %941 = vmatprep.subr.mxu0 0.0
  %942 = vmatpush1.msra.mxu0 0.0
  %943 = vmatprep.subr.mxu0 0.0
  %944 = vmatpush1.msra.mxu0 0.0
  %945 = vmatprep.subr.mxu0 0.0
  %946 = vmatpush1.msra.mxu0 0.0
  %947 = vmatprep.subr.mxu0 0.0
  %948 = vmatpush1.msra.mxu0 0.0
  %949 = vmatprep.subr.mxu0 0.0
  %950 = vmatpush1.msra.mxu0 0.0
  %951 = vmatprep.subr.mxu0 0.0
  %952 = vmatpush1.msra.mxu0 0.0
  %953 = vmatprep.subr.mxu0 0.0
  %954 = vmatpush1.msra.mxu0 0.0
  %955 = vmatprep.subr.mxu0 0.0
  %956 = vmatpush1.msra.mxu0 0.0
  %957 = vmatprep.subr.mxu0 0.0
  %958 = vmatpush1.msra.mxu0 0.0
  %959 = vmatprep.subr.mxu0 0.0
  %960 = vmatpush1.msra.mxu0 0.0
  %961 = vmatprep.subr.mxu0 0.0
  %962 = vmatpush1.msra.mxu0 0.0
  %963 = vmatprep.subr.mxu0 0.0
  %964 = vmatpush1.msra.mxu0 0.0
  %965 = vmatprep.subr.mxu0 0.0
  %966 = vmatpush1.msra.mxu0 0.0
  %967 = vmatprep.subr.mxu0 0.0
  %968 = vmatpush1.msra.mxu0 0.0
  %969 = vmatprep.subr.mxu0 0.0
  %970 = vmatpush1.msra.mxu0 0.0
  %971 = vmatprep.subr.mxu0 0.0
  %972 = vmatpush1.msra.mxu0 0.0
  %973 = vmatprep.subr.mxu0 0.0
  %974 = vmatpush1.msra.mxu0 0.0
  %975 = vmatprep.subr.mxu0 0.0
  %976 = vmatpush1.msra.mxu0 0.0
  %977 = vmatprep.mubr.f32.mxu0 0.0
  %v978 = vand.u32 %v680, 4294901760
  %v979 = vsub.f32 %v680, %v978
  %v980 = vand.u32 %v979, 4294901760
  %981 = vmatmul.mubr.f32.gmra.mrb[0].mxu0 %v980
  %v982 = vpop.f32.mrb[0].mxu0
  %v983 = vadd.f32 %v909, %v982
  %v984 = vpop.f32.mrb[0].mxu0
  %985 = vdwg.mxu0
  %986 = vmatprep.subr.mxu0 0.0
  %v987 = vand.u32 %v684, 4294901760
  %v988 = vsub.f32 %v684, %v987
  %v989 = vand.u32 %v988, 4294901760
  %990 = vmatpush1.msra.mxu0 %v989
  %991 = vmatprep.subr.mxu0 0.0
  %992 = vmatpush1.msra.mxu0 0.0
  %993 = vmatprep.subr.mxu0 0.0
  %994 = vmatpush1.msra.mxu0 0.0
  %995 = vmatprep.subr.mxu0 0.0
  %996 = vmatpush1.msra.mxu0 0.0
  %997 = vmatprep.subr.mxu0 0.0
  %998 = vmatpush1.msra.mxu0 0.0
  %999 = vmatprep.subr.mxu0 0.0
  %1000 = vmatpush1.msra.mxu0 0.0
  %1001 = vmatprep.subr.mxu0 0.0
  %1002 = vmatpush1.msra.mxu0 0.0
  %1003 = vmatprep.subr.mxu0 0.0
  %1004 = vmatpush1.msra.mxu0 0.0
  %1005 = vmatprep.subr.mxu0 0.0
  %1006 = vmatpush1.msra.mxu0 0.0
  %1007 = vmatprep.subr.mxu0 0.0
  %1008 = vmatpush1.msra.mxu0 0.0
  %1009 = vmatprep.subr.mxu0 0.0
  %1010 = vmatpush1.msra.mxu0 0.0
  %1011 = vmatprep.subr.mxu0 0.0
  %1012 = vmatpush1.msra.mxu0 0.0
  %1013 = vmatprep.subr.mxu0 0.0
  %1014 = vmatpush1.msra.mxu0 0.0
  %1015 = vmatprep.subr.mxu0 0.0
  %1016 = vmatpush1.msra.mxu0 0.0
  %1017 = vmatprep.subr.mxu0 0.0
  %1018 = vmatpush1.msra.mxu0 0.0
  %1019 = vmatprep.subr.mxu0 0.0
  %1020 = vmatpush1.msra.mxu0 0.0
  %1021 = vmatprep.subr.mxu0 0.0
  %1022 = vmatpush1.msra.mxu0 0.0
  %1023 = vmatprep.subr.mxu0 0.0
  %1024 = vmatpush1.msra.mxu0 0.0
  %1025 = vmatprep.subr.mxu0 0.0
  %1026 = vmatpush1.msra.mxu0 0.0
  %1027 = vmatprep.subr.mxu0 0.0
  %1028 = vmatpush1.msra.mxu0 0.0
  %1029 = vmatprep.subr.mxu0 0.0
  %1030 = vmatpush1.msra.mxu0 0.0
  %1031 = vmatprep.subr.mxu0 0.0
  %1032 = vmatpush1.msra.mxu0 0.0
  %1033 = vmatprep.subr.mxu0 0.0
  %1034 = vmatpush1.msra.mxu0 0.0
  %1035 = vmatprep.subr.mxu0 0.0
  %1036 = vmatpush1.msra.mxu0 0.0
  %1037 = vmatprep.subr.mxu0 0.0
  %1038 = vmatpush1.msra.mxu0 0.0
  %1039 = vmatprep.subr.mxu0 0.0
  %1040 = vmatpush1.msra.mxu0 0.0
  %1041 = vmatprep.subr.mxu0 0.0
  %1042 = vmatpush1.msra.mxu0 0.0
  %1043 = vmatprep.subr.mxu0 0.0
  %1044 = vmatpush1.msra.mxu0 0.0
  %1045 = vmatprep.subr.mxu0 0.0
  %1046 = vmatpush1.msra.mxu0 0.0
  %1047 = vmatprep.subr.mxu0 0.0
  %1048 = vmatpush1.msra.mxu0 0.0
  %1049 = vmatprep.subr.mxu0 0.0
  %1050 = vmatpush1.msra.mxu0 0.0
  %1051 = vmatprep.subr.mxu0 0.0
  %1052 = vmatpush1.msra.mxu0 0.0
  %1053 = vmatprep.mubr.f32.mxu0 0.0
  %v1054 = vand.u32 %v680, 4294901760
  %1055 = vmatmul.mubr.f32.gmra.mrb[0].mxu0 %v1054
  %v1056 = vpop.f32.mrb[0].mxu0
  %v1057 = vadd.f32 %v983, %v1056
  %v1058 = vpop.f32.mrb[0].mxu0
  %1059 = vdwg.mxu0
  %1060 = vmatprep.subr.mxu0 0.0
  %v1061 = vand.u32 %v684, 4294901760
  %1062 = vmatpush1.msra.mxu0 %v1061
  %1063 = vmatprep.subr.mxu0 0.0
  %1064 = vmatpush1.msra.mxu0 0.0
  %1065 = vmatprep.subr.mxu0 0.0
  %1066 = vmatpush1.msra.mxu0 0.0
  %1067 = vmatprep.subr.mxu0 0.0
  %1068 = vmatpush1.msra.mxu0 0.0
  %1069 = vmatprep.subr.mxu0 0.0
  %1070 = vmatpush1.msra.mxu0 0.0
  %1071 = vmatprep.subr.mxu0 0.0
  %1072 = vmatpush1.msra.mxu0 0.0
  %1073 = vmatprep.subr.mxu0 0.0
  %1074 = vmatpush1.msra.mxu0 0.0
  %1075 = vmatprep.subr.mxu0 0.0
  %1076 = vmatpush1.msra.mxu0 0.0
  %1077 = vmatprep.subr.mxu0 0.0
  %1078 = vmatpush1.msra.mxu0 0.0
  %1079 = vmatprep.subr.mxu0 0.0
  %1080 = vmatpush1.msra.mxu0 0.0
  %1081 = vmatprep.subr.mxu0 0.0
  %1082 = vmatpush1.msra.mxu0 0.0
  %1083 = vmatprep.subr.mxu0 0.0
  %1084 = vmatpush1.msra.mxu0 0.0
  %1085 = vmatprep.subr.mxu0 0.0
  %1086 = vmatpush1.msra.mxu0 0.0
  %1087 = vmatprep.subr.mxu0 0.0
  %1088 = vmatpush1.msra.mxu0 0.0
  %1089 = vmatprep.subr.mxu0 0.0
  %1090 = vmatpush1.msra.mxu0 0.0
  %1091 = vmatprep.subr.mxu0 0.0
  %1092 = vmatpush1.msra.mxu0 0.0
  %1093 = vmatprep.subr.mxu0 0.0
  %1094 = vmatpush1.msra.mxu0 0.0
  %1095 = vmatprep.subr.mxu0 0.0
  %1096 = vmatpush1.msra.mxu0 0.0
  %1097 = vmatprep.subr.mxu0 0.0
  %1098 = vmatpush1.msra.mxu0 0.0
  %1099 = vmatprep.subr.mxu0 0.0
  %1100 = vmatpush1.msra.mxu0 0.0
  %1101 = vmatprep.subr.mxu0 0.0
  %1102 = vmatpush1.msra.mxu0 0.0
  %1103 = vmatprep.subr.mxu0 0.0
  %1104 = vmatpush1.msra.mxu0 0.0
  %1105 = vmatprep.subr.mxu0 0.0
  %1106 = vmatpush1.msra.mxu0 0.0
  %1107 = vmatprep.subr.mxu0 0.0
  %1108 = vmatpush1.msra.mxu0 0.0
  %1109 = vmatprep.subr.mxu0 0.0
  %1110 = vmatpush1.msra.mxu0 0.0
  %1111 = vmatprep.subr.mxu0 0.0
  %1112 = vmatpush1.msra.mxu0 0.0
  %1113 = vmatprep.subr.mxu0 0.0
  %1114 = vmatpush1.msra.mxu0 0.0
  %1115 = vmatprep.subr.mxu0 0.0
  %1116 = vmatpush1.msra.mxu0 0.0
  %1117 = vmatprep.subr.mxu0 0.0
  %1118 = vmatpush1.msra.mxu0 0.0
  %1119 = vmatprep.subr.mxu0 0.0
  %1120 = vmatpush1.msra.mxu0 0.0
  %1121 = vmatprep.subr.mxu0 0.0
  %1122 = vmatpush1.msra.mxu0 0.0
  %1123 = vmatprep.subr.mxu0 0.0
  %1124 = vmatpush1.msra.mxu0 0.0
  %1125 = vmatprep.mubr.f32.mxu0 0.0
  %v1126 = vand.u32 %v680, 4294901760
  %1127 = vmatmul.mubr.f32.gmra.mrb[0].mxu0 %v1126
  %v1128 = vpop.f32.mrb[0].mxu0
  %v1129 = vadd.f32 %v1057, %v1128
  %v1130 = vpop.f32.mrb[0].mxu0
  %1131 = vdwg.mxu0
  %v1132 = vsub.f32 %v18, %v1129
  %v1133 = vmul.f32 %v1132, %v1132
  %1134 = vmatprep.subr.mxu0 0.0
  %v1135 = vand.u32 %v19, 4294901760
  %1136 = vmatpush1.msra.mxu0 %v1135
  %1137 = vmatprep.subr.mxu0 0.0
  %v1138 = vand.u32 %v20, 4294901760
  %1139 = vmatpush1.msra.mxu0 %v1138
  %1140 = vmatprep.subr.mxu0 0.0
  %v1141 = vand.u32 %v21, 4294901760
  %1142 = vmatpush1.msra.mxu0 %v1141
  %1143 = vmatprep.subr.mxu0 0.0
  %v1144 = vand.u32 %v22, 4294901760
  %1145 = vmatpush1.msra.mxu0 %v1144
  %1146 = vmatprep.subr.mxu0 0.0
  %v1147 = vand.u32 %v23, 4294901760
  %1148 = vmatpush1.msra.mxu0 %v1147
  %1149 = vmatprep.subr.mxu0 0.0
  %v1150 = vand.u32 %v24, 4294901760
  %1151 = vmatpush1.msra.mxu0 %v1150
  %1152 = vmatprep.subr.mxu0 0.0
  %v1153 = vand.u32 %v25, 4294901760
  %1154 = vmatpush1.msra.mxu0 %v1153
  %1155 = vmatprep.subr.mxu0 0.0
  %v1156 = vand.u32 %v26, 4294901760
  %1157 = vmatpush1.msra.mxu0 %v1156
  %1158 = vmatprep.subr.mxu0 0.0
  %v1159 = vand.u32 %v27, 4294901760
  %1160 = vmatpush1.msra.mxu0 %v1159
  %1161 = vmatprep.subr.mxu0 0.0
  %v1162 = vand.u32 %v28, 4294901760
  %1163 = vmatpush1.msra.mxu0 %v1162
  %1164 = vmatprep.subr.mxu0 0.0
  %v1165 = vand.u32 %v29, 4294901760
  %1166 = vmatpush1.msra.mxu0 %v1165
  %1167 = vmatprep.subr.mxu0 0.0
  %v1168 = vand.u32 %v30, 4294901760
  %1169 = vmatpush1.msra.mxu0 %v1168
  %1170 = vmatprep.subr.mxu0 0.0
  %v1171 = vand.u32 %v31, 4294901760
  %1172 = vmatpush1.msra.mxu0 %v1171
  %1173 = vmatprep.subr.mxu0 0.0
  %v1174 = vand.u32 %v32, 4294901760
  %1175 = vmatpush1.msra.mxu0 %v1174
  %1176 = vmatprep.subr.mxu0 0.0
  %v1177 = vand.u32 %v33, 4294901760
  %1178 = vmatpush1.msra.mxu0 %v1177
  %1179 = vmatprep.subr.mxu0 0.0
  %v1180 = vand.u32 %v34, 4294901760
  %1181 = vmatpush1.msra.mxu0 %v1180
  %1182 = vmatprep.subr.mxu0 0.0
  %1183 = vmatpush1.msra.mxu0 0.0
  %1184 = vmatprep.subr.mxu0 0.0
  %1185 = vmatpush1.msra.mxu0 0.0
  %1186 = vmatprep.subr.mxu0 0.0
  %1187 = vmatpush1.msra.mxu0 0.0
  %1188 = vmatprep.subr.mxu0 0.0
  %1189 = vmatpush1.msra.mxu0 0.0
  %1190 = vmatprep.subr.mxu0 0.0
  %1191 = vmatpush1.msra.mxu0 0.0
  %1192 = vmatprep.subr.mxu0 0.0
  %1193 = vmatpush1.msra.mxu0 0.0
  %1194 = vmatprep.subr.mxu0 0.0
  %1195 = vmatpush1.msra.mxu0 0.0
  %1196 = vmatprep.subr.mxu0 0.0
  %1197 = vmatpush1.msra.mxu0 0.0
  %1198 = vmatprep.subr.mxu0 0.0
  %1199 = vmatpush1.msra.mxu0 0.0
  %1200 = vmatprep.subr.mxu0 0.0
  %1201 = vmatpush1.msra.mxu0 0.0
  %1202 = vmatprep.subr.mxu0 0.0
  %1203 = vmatpush1.msra.mxu0 0.0
  %1204 = vmatprep.subr.mxu0 0.0
  %1205 = vmatpush1.msra.mxu0 0.0
  %1206 = vmatprep.subr.mxu0 0.0
  %1207 = vmatpush1.msra.mxu0 0.0
  %1208 = vmatprep.subr.mxu0 0.0
  %1209 = vmatpush1.msra.mxu0 0.0
  %1210 = vmatprep.subr.mxu0 0.0
  %1211 = vmatpush1.msra.mxu0 0.0
  %1212 = vmatprep.subr.mxu0 0.0
  %1213 = vmatpush1.msra.mxu0 0.0
  %1214 = vmatprep.mubr.f32.mxu0 0.0
  %v1215 = vand.u32 %v1133, 4294901760
  %v1216 = vsub.f32 %v1133, %v1215
  %v1217 = vand.u32 %v1216, 4294901760
  %v1218 = vsub.f32 %v1216, %v1217
  %v1219 = vand.u32 %v1218, 4294901760
  %1220 = vmatmul.mubr.f32.gmra.mrb[0].mxu0 %v1219
  %v1221 = vpop.f32.mrb[0].mxu0
  %v1222 = vadd.f32 0.0, %v1221
  %v1223 = vpop.f32.mrb[0].mxu0
  %1224 = vdwg.mxu0
  %1225 = vmatprep.subr.mxu0 0.0
  %v1226 = vand.u32 %v19, 4294901760
  %v1227 = vsub.f32 %v19, %v1226
  %v1228 = vand.u32 %v1227, 4294901760
  %v1229 = vsub.f32 %v1227, %v1228
  %v1230 = vand.u32 %v1229, 4294901760
  %1231 = vmatpush1.msra.mxu0 %v1230
  %1232 = vmatprep.subr.mxu0 0.0
  %v1233 = vand.u32 %v20, 4294901760
  %v1234 = vsub.f32 %v20, %v1233
  %v1235 = vand.u32 %v1234, 4294901760
  %v1236 = vsub.f32 %v1234, %v1235
  %v1237 = vand.u32 %v1236, 4294901760
  %1238 = vmatpush1.msra.mxu0 %v1237
  %1239 = vmatprep.subr.mxu0 0.0
  %v1240 = vand.u32 %v21, 4294901760
  %v1241 = vsub.f32 %v21, %v1240
  %v1242 = vand.u32 %v1241, 4294901760
  %v1243 = vsub.f32 %v1241, %v1242
  %v1244 = vand.u32 %v1243, 4294901760
  %1245 = vmatpush1.msra.mxu0 %v1244
  %1246 = vmatprep.subr.mxu0 0.0
  %v1247 = vand.u32 %v22, 4294901760
  %v1248 = vsub.f32 %v22, %v1247
  %v1249 = vand.u32 %v1248, 4294901760
  %v1250 = vsub.f32 %v1248, %v1249
  %v1251 = vand.u32 %v1250, 4294901760
  %1252 = vmatpush1.msra.mxu0 %v1251
  %1253 = vmatprep.subr.mxu0 0.0
  %v1254 = vand.u32 %v23, 4294901760
  %v1255 = vsub.f32 %v23, %v1254
  %v1256 = vand.u32 %v1255, 4294901760
  %v1257 = vsub.f32 %v1255, %v1256
  %v1258 = vand.u32 %v1257, 4294901760
  %1259 = vmatpush1.msra.mxu0 %v1258
  %1260 = vmatprep.subr.mxu0 0.0
  %v1261 = vand.u32 %v24, 4294901760
  %v1262 = vsub.f32 %v24, %v1261
  %v1263 = vand.u32 %v1262, 4294901760
  %v1264 = vsub.f32 %v1262, %v1263
  %v1265 = vand.u32 %v1264, 4294901760
  %1266 = vmatpush1.msra.mxu0 %v1265
  %1267 = vmatprep.subr.mxu0 0.0
  %v1268 = vand.u32 %v25, 4294901760
  %v1269 = vsub.f32 %v25, %v1268
  %v1270 = vand.u32 %v1269, 4294901760
  %v1271 = vsub.f32 %v1269, %v1270
  %v1272 = vand.u32 %v1271, 4294901760
  %1273 = vmatpush1.msra.mxu0 %v1272
  %1274 = vmatprep.subr.mxu0 0.0
  %v1275 = vand.u32 %v26, 4294901760
  %v1276 = vsub.f32 %v26, %v1275
  %v1277 = vand.u32 %v1276, 4294901760
  %v1278 = vsub.f32 %v1276, %v1277
  %v1279 = vand.u32 %v1278, 4294901760
  %1280 = vmatpush1.msra.mxu0 %v1279
  %1281 = vmatprep.subr.mxu0 0.0
  %v1282 = vand.u32 %v27, 4294901760
  %v1283 = vsub.f32 %v27, %v1282
  %v1284 = vand.u32 %v1283, 4294901760
  %v1285 = vsub.f32 %v1283, %v1284
  %v1286 = vand.u32 %v1285, 4294901760
  %1287 = vmatpush1.msra.mxu0 %v1286
  %1288 = vmatprep.subr.mxu0 0.0
  %v1289 = vand.u32 %v28, 4294901760
  %v1290 = vsub.f32 %v28, %v1289
  %v1291 = vand.u32 %v1290, 4294901760
  %v1292 = vsub.f32 %v1290, %v1291
  %v1293 = vand.u32 %v1292, 4294901760
  %1294 = vmatpush1.msra.mxu0 %v1293
  %1295 = vmatprep.subr.mxu0 0.0
  %v1296 = vand.u32 %v29, 4294901760
  %v1297 = vsub.f32 %v29, %v1296
  %v1298 = vand.u32 %v1297, 4294901760
  %v1299 = vsub.f32 %v1297, %v1298
  %v1300 = vand.u32 %v1299, 4294901760
  %1301 = vmatpush1.msra.mxu0 %v1300
  %1302 = vmatprep.subr.mxu0 0.0
  %v1303 = vand.u32 %v30, 4294901760
  %v1304 = vsub.f32 %v30, %v1303
  %v1305 = vand.u32 %v1304, 4294901760
  %v1306 = vsub.f32 %v1304, %v1305
  %v1307 = vand.u32 %v1306, 4294901760
  %1308 = vmatpush1.msra.mxu0 %v1307
  %1309 = vmatprep.subr.mxu0 0.0
  %v1310 = vand.u32 %v31, 4294901760
  %v1311 = vsub.f32 %v31, %v1310
  %v1312 = vand.u32 %v1311, 4294901760
  %v1313 = vsub.f32 %v1311, %v1312
  %v1314 = vand.u32 %v1313, 4294901760
  %1315 = vmatpush1.msra.mxu0 %v1314
  %1316 = vmatprep.subr.mxu0 0.0
  %v1317 = vand.u32 %v32, 4294901760
  %v1318 = vsub.f32 %v32, %v1317
  %v1319 = vand.u32 %v1318, 4294901760
  %v1320 = vsub.f32 %v1318, %v1319
  %v1321 = vand.u32 %v1320, 4294901760
  %1322 = vmatpush1.msra.mxu0 %v1321
  %1323 = vmatprep.subr.mxu0 0.0
  %v1324 = vand.u32 %v33, 4294901760
  %v1325 = vsub.f32 %v33, %v1324
  %v1326 = vand.u32 %v1325, 4294901760
  %v1327 = vsub.f32 %v1325, %v1326
  %v1328 = vand.u32 %v1327, 4294901760
  %1329 = vmatpush1.msra.mxu0 %v1328
  %1330 = vmatprep.subr.mxu0 0.0
  %v1331 = vand.u32 %v34, 4294901760
  %v1332 = vsub.f32 %v34, %v1331
  %v1333 = vand.u32 %v1332, 4294901760
  %v1334 = vsub.f32 %v1332, %v1333
  %v1335 = vand.u32 %v1334, 4294901760
  %1336 = vmatpush1.msra.mxu0 %v1335
  %1337 = vmatprep.subr.mxu0 0.0
  %1338 = vmatpush1.msra.mxu0 0.0
  %1339 = vmatprep.subr.mxu0 0.0
  %1340 = vmatpush1.msra.mxu0 0.0
  %1341 = vmatprep.subr.mxu0 0.0
  %1342 = vmatpush1.msra.mxu0 0.0
  %1343 = vmatprep.subr.mxu0 0.0
  %1344 = vmatpush1.msra.mxu0 0.0
  %1345 = vmatprep.subr.mxu0 0.0
  %1346 = vmatpush1.msra.mxu0 0.0
  %1347 = vmatprep.subr.mxu0 0.0
  %1348 = vmatpush1.msra.mxu0 0.0
  %1349 = vmatprep.subr.mxu0 0.0
  %1350 = vmatpush1.msra.mxu0 0.0
  %1351 = vmatprep.subr.mxu0 0.0
  %1352 = vmatpush1.msra.mxu0 0.0
  %1353 = vmatprep.subr.mxu0 0.0
  %1354 = vmatpush1.msra.mxu0 0.0
  %1355 = vmatprep.subr.mxu0 0.0
  %1356 = vmatpush1.msra.mxu0 0.0
  %1357 = vmatprep.subr.mxu0 0.0
  %1358 = vmatpush1.msra.mxu0 0.0
  %1359 = vmatprep.subr.mxu0 0.0
  %1360 = vmatpush1.msra.mxu0 0.0
  %1361 = vmatprep.subr.mxu0 0.0
  %1362 = vmatpush1.msra.mxu0 0.0
  %1363 = vmatprep.subr.mxu0 0.0
  %1364 = vmatpush1.msra.mxu0 0.0
  %1365 = vmatprep.subr.mxu0 0.0
  %1366 = vmatpush1.msra.mxu0 0.0
  %1367 = vmatprep.subr.mxu0 0.0
  %1368 = vmatpush1.msra.mxu0 0.0
  %1369 = vmatprep.mubr.f32.mxu0 0.0
  %v1370 = vand.u32 %v1133, 4294901760
  %1371 = vmatmul.mubr.f32.gmra.mrb[0].mxu0 %v1370
  %v1372 = vpop.f32.mrb[0].mxu0
  %v1373 = vadd.f32 %v1222, %v1372
  %v1374 = vpop.f32.mrb[0].mxu0
  %1375 = vdwg.mxu0
  %1376 = vmatprep.subr.mxu0 0.0
  %v1377 = vand.u32 %v19, 4294901760
  %v1378 = vsub.f32 %v19, %v1377
  %1379 = vmatpush1.msra.mxu0 %v1378
  %1380 = vmatprep.subr.mxu0 0.0
  %v1381 = vand.u32 %v20, 4294901760
  %v1382 = vsub.f32 %v20, %v1381
  %1383 = vmatpush1.msra.mxu0 %v1382
  %1384 = vmatprep.subr.mxu0 0.0
  %v1385 = vand.u32 %v21, 4294901760
  %v1386 = vsub.f32 %v21, %v1385
  %1387 = vmatpush1.msra.mxu0 %v1386
  %1388 = vmatprep.subr.mxu0 0.0
  %v1389 = vand.u32 %v22, 4294901760
  %v1390 = vsub.f32 %v22, %v1389
  %1391 = vmatpush1.msra.mxu0 %v1390
  %1392 = vmatprep.subr.mxu0 0.0
  %v1393 = vand.u32 %v23, 4294901760
  %v1394 = vsub.f32 %v23, %v1393
  %1395 = vmatpush1.msra.mxu0 %v1394
  %1396 = vmatprep.subr.mxu0 0.0
  %v1397 = vand.u32 %v24, 4294901760
  %v1398 = vsub.f32 %v24, %v1397
  %1399 = vmatpush1.msra.mxu0 %v1398
  %1400 = vmatprep.subr.mxu0 0.0
  %v1401 = vand.u32 %v25, 4294901760
  %v1402 = vsub.f32 %v25, %v1401
  %1403 = vmatpush1.msra.mxu0 %v1402
  %1404 = vmatprep.subr.mxu0 0.0
  %v1405 = vand.u32 %v26, 4294901760
  %v1406 = vsub.f32 %v26, %v1405
  %1407 = vmatpush1.msra.mxu0 %v1406
  %1408 = vmatprep.subr.mxu0 0.0
  %v1409 = vand.u32 %v27, 4294901760
  %v1410 = vsub.f32 %v27, %v1409
  %1411 = vmatpush1.msra.mxu0 %v1410
  %1412 = vmatprep.subr.mxu0 0.0
  %v1413 = vand.u32 %v28, 4294901760
  %v1414 = vsub.f32 %v28, %v1413
  %1415 = vmatpush1.msra.mxu0 %v1414
  %1416 = vmatprep.subr.mxu0 0.0
  %v1417 = vand.u32 %v29, 4294901760
  %v1418 = vsub.f32 %v29, %v1417
  %1419 = vmatpush1.msra.mxu0 %v1418
  %1420 = vmatprep.subr.mxu0 0.0
  %v1421 = vand.u32 %v30, 4294901760
  %v1422 = vsub.f32 %v30, %v1421
  %1423 = vmatpush1.msra.mxu0 %v1422
  %1424 = vmatprep.subr.mxu0 0.0
  %v1425 = vand.u32 %v31, 4294901760
  %v1426 = vsub.f32 %v31, %v1425
  %1427 = vmatpush1.msra.mxu0 %v1426
  %1428 = vmatprep.subr.mxu0 0.0
  %v1429 = vand.u32 %v32, 4294901760
  %v1430 = vsub.f32 %v32, %v1429
  %1431 = vmatpush1.msra.mxu0 %v1430
  %1432 = vmatprep.subr.mxu0 0.0
  %v1433 = vand.u32 %v33, 4294901760
  %v1434 = vsub.f32 %v33, %v1433
  %1435 = vmatpush1.msra.mxu0 %v1434
  %1436 = vmatprep.subr.mxu0 0.0
  %v1437 = vand.u32 %v34, 4294901760
  %v1438 = vsub.f32 %v34, %v1437
  %1439 = vmatpush1.msra.mxu0 %v1438
  %1440 = vmatprep.subr.mxu0 0.0
  %1441 = vmatpush1.msra.mxu0 0.0
  %1442 = vmatprep.subr.mxu0 0.0
  %1443 = vmatpush1.msra.mxu0 0.0
  %1444 = vmatprep.subr.mxu0 0.0
  %1445 = vmatpush1.msra.mxu0 0.0
  %1446 = vmatprep.subr.mxu0 0.0
  %1447 = vmatpush1.msra.mxu0 0.0
  %1448 = vmatprep.subr.mxu0 0.0
  %1449 = vmatpush1.msra.mxu0 0.0
  %1450 = vmatprep.subr.mxu0 0.0
  %1451 = vmatpush1.msra.mxu0 0.0
  %1452 = vmatprep.subr.mxu0 0.0
  %1453 = vmatpush1.msra.mxu0 0.0
  %1454 = vmatprep.subr.mxu0 0.0
  %1455 = vmatpush1.msra.mxu0 0.0
  %1456 = vmatprep.subr.mxu0 0.0
  %1457 = vmatpush1.msra.mxu0 0.0
  %1458 = vmatprep.subr.mxu0 0.0
  %1459 = vmatpush1.msra.mxu0 0.0
  %1460 = vmatprep.subr.mxu0 0.0
  %1461 = vmatpush1.msra.mxu0 0.0
  %1462 = vmatprep.subr.mxu0 0.0
  %1463 = vmatpush1.msra.mxu0 0.0
  %1464 = vmatprep.subr.mxu0 0.0
  %1465 = vmatpush1.msra.mxu0 0.0
  %1466 = vmatprep.subr.mxu0 0.0
  %1467 = vmatpush1.msra.mxu0 0.0
  %1468 = vmatprep.subr.mxu0 0.0
  %1469 = vmatpush1.msra.mxu0 0.0
  %1470 = vmatprep.subr.mxu0 0.0
  %1471 = vmatpush1.msra.mxu0 0.0
  %1472 = vmatprep.mubr.f32.mxu0 0.0
  %v1473 = vand.u32 %v1133, 4294901760
  %v1474 = vsub.f32 %v1133, %v1473
  %1475 = vmatmul.mubr.f32.gmra.mrb[0].mxu0 %v1474
  %v1476 = vpop.f32.mrb[0].mxu0
  %v1477 = vadd.f32 %v1373, %v1476
  %v1478 = vpop.f32.mrb[0].mxu0
  %1479 = vdwg.mxu0
  %1480 = vmatprep.subr.mxu0 0.0
  %v1481 = vand.u32 %v19, 4294901760
  %1482 = vmatpush1.msra.mxu0 %v1481
  %1483 = vmatprep.subr.mxu0 0.0
  %v1484 = vand.u32 %v20, 4294901760
  %1485 = vmatpush1.msra.mxu0 %v1484
  %1486 = vmatprep.subr.mxu0 0.0
  %v1487 = vand.u32 %v21, 4294901760
  %1488 = vmatpush1.msra.mxu0 %v1487
  %1489 = vmatprep.subr.mxu0 0.0
  %v1490 = vand.u32 %v22, 4294901760
  %1491 = vmatpush1.msra.mxu0 %v1490
  %1492 = vmatprep.subr.mxu0 0.0
  %v1493 = vand.u32 %v23, 4294901760
  %1494 = vmatpush1.msra.mxu0 %v1493
  %1495 = vmatprep.subr.mxu0 0.0
  %v1496 = vand.u32 %v24, 4294901760
  %1497 = vmatpush1.msra.mxu0 %v1496
  %1498 = vmatprep.subr.mxu0 0.0
  %v1499 = vand.u32 %v25, 4294901760
  %1500 = vmatpush1.msra.mxu0 %v1499
  %1501 = vmatprep.subr.mxu0 0.0
  %v1502 = vand.u32 %v26, 4294901760
  %1503 = vmatpush1.msra.mxu0 %v1502
  %1504 = vmatprep.subr.mxu0 0.0
  %v1505 = vand.u32 %v27, 4294901760
  %1506 = vmatpush1.msra.mxu0 %v1505
  %1507 = vmatprep.subr.mxu0 0.0
  %v1508 = vand.u32 %v28, 4294901760
  %1509 = vmatpush1.msra.mxu0 %v1508
  %1510 = vmatprep.subr.mxu0 0.0
  %v1511 = vand.u32 %v29, 4294901760
  %1512 = vmatpush1.msra.mxu0 %v1511
  %1513 = vmatprep.subr.mxu0 0.0
  %v1514 = vand.u32 %v30, 4294901760
  %1515 = vmatpush1.msra.mxu0 %v1514
  %1516 = vmatprep.subr.mxu0 0.0
  %v1517 = vand.u32 %v31, 4294901760
  %1518 = vmatpush1.msra.mxu0 %v1517
  %1519 = vmatprep.subr.mxu0 0.0
  %v1520 = vand.u32 %v32, 4294901760
  %1521 = vmatpush1.msra.mxu0 %v1520
  %1522 = vmatprep.subr.mxu0 0.0
  %v1523 = vand.u32 %v33, 4294901760
  %1524 = vmatpush1.msra.mxu0 %v1523
  %1525 = vmatprep.subr.mxu0 0.0
  %v1526 = vand.u32 %v34, 4294901760
  %1527 = vmatpush1.msra.mxu0 %v1526
  %1528 = vmatprep.subr.mxu0 0.0
  %1529 = vmatpush1.msra.mxu0 0.0
  %1530 = vmatprep.subr.mxu0 0.0
  %1531 = vmatpush1.msra.mxu0 0.0
  %1532 = vmatprep.subr.mxu0 0.0
  %1533 = vmatpush1.msra.mxu0 0.0
  %1534 = vmatprep.subr.mxu0 0.0
  %1535 = vmatpush1.msra.mxu0 0.0
  %1536 = vmatprep.subr.mxu0 0.0
  %1537 = vmatpush1.msra.mxu0 0.0
  %1538 = vmatprep.subr.mxu0 0.0
  %1539 = vmatpush1.msra.mxu0 0.0
  %1540 = vmatprep.subr.mxu0 0.0
  %1541 = vmatpush1.msra.mxu0 0.0
  %1542 = vmatprep.subr.mxu0 0.0
  %1543 = vmatpush1.msra.mxu0 0.0
  %1544 = vmatprep.subr.mxu0 0.0
  %1545 = vmatpush1.msra.mxu0 0.0
  %1546 = vmatprep.subr.mxu0 0.0
  %1547 = vmatpush1.msra.mxu0 0.0
  %1548 = vmatprep.subr.mxu0 0.0
  %1549 = vmatpush1.msra.mxu0 0.0
  %1550 = vmatprep.subr.mxu0 0.0
  %1551 = vmatpush1.msra.mxu0 0.0
  %1552 = vmatprep.subr.mxu0 0.0
  %1553 = vmatpush1.msra.mxu0 0.0
  %1554 = vmatprep.subr.mxu0 0.0
  %1555 = vmatpush1.msra.mxu0 0.0
  %1556 = vmatprep.subr.mxu0 0.0
  %1557 = vmatpush1.msra.mxu0 0.0
  %1558 = vmatprep.subr.mxu0 0.0
  %1559 = vmatpush1.msra.mxu0 0.0
  %1560 = vmatprep.mubr.f32.mxu0 0.0
  %v1561 = vand.u32 %v1133, 4294901760
  %v1562 = vsub.f32 %v1133, %v1561
  %v1563 = vand.u32 %v1562, 4294901760
  %1564 = vmatmul.mubr.f32.gmra.mrb[0].mxu0 %v1563
  %v1565 = vpop.f32.mrb[0].mxu0
  %v1566 = vadd.f32 %v1477, %v1565
  %v1567 = vpop.f32.mrb[0].mxu0
  %1568 = vdwg.mxu0
  %1569 = vmatprep.subr.mxu0 0.0
  %v1570 = vand.u32 %v19, 4294901760
  %v1571 = vsub.f32 %v19, %v1570
  %v1572 = vand.u32 %v1571, 4294901760
  %1573 = vmatpush1.msra.mxu0 %v1572
  %1574 = vmatprep.subr.mxu0 0.0
  %v1575 = vand.u32 %v20, 4294901760
  %v1576 = vsub.f32 %v20, %v1575
  %v1577 = vand.u32 %v1576, 4294901760
  %1578 = vmatpush1.msra.mxu0 %v1577
  %1579 = vmatprep.subr.mxu0 0.0
  %v1580 = vand.u32 %v21, 4294901760
  %v1581 = vsub.f32 %v21, %v1580
  %v1582 = vand.u32 %v1581, 4294901760
  %1583 = vmatpush1.msra.mxu0 %v1582
  %1584 = vmatprep.subr.mxu0 0.0
  %v1585 = vand.u32 %v22, 4294901760
  %v1586 = vsub.f32 %v22, %v1585
  %v1587 = vand.u32 %v1586, 4294901760
  %1588 = vmatpush1.msra.mxu0 %v1587
  %1589 = vmatprep.subr.mxu0 0.0
  %v1590 = vand.u32 %v23, 4294901760
  %v1591 = vsub.f32 %v23, %v1590
  %v1592 = vand.u32 %v1591, 4294901760
  %1593 = vmatpush1.msra.mxu0 %v1592
  %1594 = vmatprep.subr.mxu0 0.0
  %v1595 = vand.u32 %v24, 4294901760
  %v1596 = vsub.f32 %v24, %v1595
  %v1597 = vand.u32 %v1596, 4294901760
  %1598 = vmatpush1.msra.mxu0 %v1597
  %1599 = vmatprep.subr.mxu0 0.0
  %v1600 = vand.u32 %v25, 4294901760
  %v1601 = vsub.f32 %v25, %v1600
  %v1602 = vand.u32 %v1601, 4294901760
  %1603 = vmatpush1.msra.mxu0 %v1602
  %1604 = vmatprep.subr.mxu0 0.0
  %v1605 = vand.u32 %v26, 4294901760
  %v1606 = vsub.f32 %v26, %v1605
  %v1607 = vand.u32 %v1606, 4294901760
  %1608 = vmatpush1.msra.mxu0 %v1607
  %1609 = vmatprep.subr.mxu0 0.0
  %v1610 = vand.u32 %v27, 4294901760
  %v1611 = vsub.f32 %v27, %v1610
  %v1612 = vand.u32 %v1611, 4294901760
  %1613 = vmatpush1.msra.mxu0 %v1612
  %1614 = vmatprep.subr.mxu0 0.0
  %v1615 = vand.u32 %v28, 4294901760
  %v1616 = vsub.f32 %v28, %v1615
  %v1617 = vand.u32 %v1616, 4294901760
  %1618 = vmatpush1.msra.mxu0 %v1617
  %1619 = vmatprep.subr.mxu0 0.0
  %v1620 = vand.u32 %v29, 4294901760
  %v1621 = vsub.f32 %v29, %v1620
  %v1622 = vand.u32 %v1621, 4294901760
  %1623 = vmatpush1.msra.mxu0 %v1622
  %1624 = vmatprep.subr.mxu0 0.0
  %v1625 = vand.u32 %v30, 4294901760
  %v1626 = vsub.f32 %v30, %v1625
  %v1627 = vand.u32 %v1626, 4294901760
  %1628 = vmatpush1.msra.mxu0 %v1627
  %1629 = vmatprep.subr.mxu0 0.0
  %v1630 = vand.u32 %v31, 4294901760
  %v1631 = vsub.f32 %v31, %v1630
  %v1632 = vand.u32 %v1631, 4294901760
  %1633 = vmatpush1.msra.mxu0 %v1632
  %1634 = vmatprep.subr.mxu0 0.0
  %v1635 = vand.u32 %v32, 4294901760
  %v1636 = vsub.f32 %v32, %v1635
  %v1637 = vand.u32 %v1636, 4294901760
  %1638 = vmatpush1.msra.mxu0 %v1637
  %1639 = vmatprep.subr.mxu0 0.0
  %v1640 = vand.u32 %v33, 4294901760
  %v1641 = vsub.f32 %v33, %v1640
  %v1642 = vand.u32 %v1641, 4294901760
  %1643 = vmatpush1.msra.mxu0 %v1642
  %1644 = vmatprep.subr.mxu0 0.0
  %v1645 = vand.u32 %v34, 4294901760
  %v1646 = vsub.f32 %v34, %v1645
  %v1647 = vand.u32 %v1646, 4294901760
  %1648 = vmatpush1.msra.mxu0 %v1647
  %1649 = vmatprep.subr.mxu0 0.0
  %1650 = vmatpush1.msra.mxu0 0.0
  %1651 = vmatprep.subr.mxu0 0.0
  %1652 = vmatpush1.msra.mxu0 0.0
  %1653 = vmatprep.subr.mxu0 0.0
  %1654 = vmatpush1.msra.mxu0 0.0
  %1655 = vmatprep.subr.mxu0 0.0
  %1656 = vmatpush1.msra.mxu0 0.0
  %1657 = vmatprep.subr.mxu0 0.0
  %1658 = vmatpush1.msra.mxu0 0.0
  %1659 = vmatprep.subr.mxu0 0.0
  %1660 = vmatpush1.msra.mxu0 0.0
  %1661 = vmatprep.subr.mxu0 0.0
  %1662 = vmatpush1.msra.mxu0 0.0
  %1663 = vmatprep.subr.mxu0 0.0
  %1664 = vmatpush1.msra.mxu0 0.0
  %1665 = vmatprep.subr.mxu0 0.0
  %1666 = vmatpush1.msra.mxu0 0.0
  %1667 = vmatprep.subr.mxu0 0.0
  %1668 = vmatpush1.msra.mxu0 0.0
  %1669 = vmatprep.subr.mxu0 0.0
  %1670 = vmatpush1.msra.mxu0 0.0
  %1671 = vmatprep.subr.mxu0 0.0
  %1672 = vmatpush1.msra.mxu0 0.0
  %1673 = vmatprep.subr.mxu0 0.0
  %1674 = vmatpush1.msra.mxu0 0.0
  %1675 = vmatprep.subr.mxu0 0.0
  %1676 = vmatpush1.msra.mxu0 0.0
  %1677 = vmatprep.subr.mxu0 0.0
  %1678 = vmatpush1.msra.mxu0 0.0
  %1679 = vmatprep.subr.mxu0 0.0
  %1680 = vmatpush1.msra.mxu0 0.0
  %1681 = vmatprep.mubr.f32.mxu0 0.0
  %v1682 = vand.u32 %v1133, 4294901760
  %1683 = vmatmul.mubr.f32.gmra.mrb[0].mxu0 %v1682
  %v1684 = vpop.f32.mrb[0].mxu0
  %v1685 = vadd.f32 %v1566, %v1684
  %v1686 = vpop.f32.mrb[0].mxu0
  %1687 = vdwg.mxu0
  %1688 = vmatprep.subr.mxu0 0.0
  %v1689 = vand.u32 %v19, 4294901760
  %1690 = vmatpush1.msra.mxu0 %v1689
  %1691 = vmatprep.subr.mxu0 0.0
  %v1692 = vand.u32 %v20, 4294901760
  %1693 = vmatpush1.msra.mxu0 %v1692
  %1694 = vmatprep.subr.mxu0 0.0
  %v1695 = vand.u32 %v21, 4294901760
  %1696 = vmatpush1.msra.mxu0 %v1695
  %1697 = vmatprep.subr.mxu0 0.0
  %v1698 = vand.u32 %v22, 4294901760
  %1699 = vmatpush1.msra.mxu0 %v1698
  %1700 = vmatprep.subr.mxu0 0.0
  %v1701 = vand.u32 %v23, 4294901760
  %1702 = vmatpush1.msra.mxu0 %v1701
  %1703 = vmatprep.subr.mxu0 0.0
  %v1704 = vand.u32 %v24, 4294901760
  %1705 = vmatpush1.msra.mxu0 %v1704
  %1706 = vmatprep.subr.mxu0 0.0
  %v1707 = vand.u32 %v25, 4294901760
  %1708 = vmatpush1.msra.mxu0 %v1707
  %1709 = vmatprep.subr.mxu0 0.0
  %v1710 = vand.u32 %v26, 4294901760
  %1711 = vmatpush1.msra.mxu0 %v1710
  %1712 = vmatprep.subr.mxu0 0.0
  %v1713 = vand.u32 %v27, 4294901760
  %1714 = vmatpush1.msra.mxu0 %v1713
  %1715 = vmatprep.subr.mxu0 0.0
  %v1716 = vand.u32 %v28, 4294901760
  %1717 = vmatpush1.msra.mxu0 %v1716
  %1718 = vmatprep.subr.mxu0 0.0
  %v1719 = vand.u32 %v29, 4294901760
  %1720 = vmatpush1.msra.mxu0 %v1719
  %1721 = vmatprep.subr.mxu0 0.0
  %v1722 = vand.u32 %v30, 4294901760
  %1723 = vmatpush1.msra.mxu0 %v1722
  %1724 = vmatprep.subr.mxu0 0.0
  %v1725 = vand.u32 %v31, 4294901760
  %1726 = vmatpush1.msra.mxu0 %v1725
  %1727 = vmatprep.subr.mxu0 0.0
  %v1728 = vand.u32 %v32, 4294901760
  %1729 = vmatpush1.msra.mxu0 %v1728
  %1730 = vmatprep.subr.mxu0 0.0
  %v1731 = vand.u32 %v33, 4294901760
  %1732 = vmatpush1.msra.mxu0 %v1731
  %1733 = vmatprep.subr.mxu0 0.0
  %v1734 = vand.u32 %v34, 4294901760
  %1735 = vmatpush1.msra.mxu0 %v1734
  %1736 = vmatprep.subr.mxu0 0.0
  %1737 = vmatpush1.msra.mxu0 0.0
  %1738 = vmatprep.subr.mxu0 0.0
  %1739 = vmatpush1.msra.mxu0 0.0
  %1740 = vmatprep.subr.mxu0 0.0
  %1741 = vmatpush1.msra.mxu0 0.0
  %1742 = vmatprep.subr.mxu0 0.0
  %1743 = vmatpush1.msra.mxu0 0.0
  %1744 = vmatprep.subr.mxu0 0.0
  %1745 = vmatpush1.msra.mxu0 0.0
  %1746 = vmatprep.subr.mxu0 0.0
  %1747 = vmatpush1.msra.mxu0 0.0
  %1748 = vmatprep.subr.mxu0 0.0
  %1749 = vmatpush1.msra.mxu0 0.0
  %1750 = vmatprep.subr.mxu0 0.0
  %1751 = vmatpush1.msra.mxu0 0.0
  %1752 = vmatprep.subr.mxu0 0.0
  %1753 = vmatpush1.msra.mxu0 0.0
  %1754 = vmatprep.subr.mxu0 0.0
  %1755 = vmatpush1.msra.mxu0 0.0
  %1756 = vmatprep.subr.mxu0 0.0
  %1757 = vmatpush1.msra.mxu0 0.0
  %1758 = vmatprep.subr.mxu0 0.0
  %1759 = vmatpush1.msra.mxu0 0.0
  %1760 = vmatprep.subr.mxu0 0.0
  %1761 = vmatpush1.msra.mxu0 0.0
  %1762 = vmatprep.subr.mxu0 0.0
  %1763 = vmatpush1.msra.mxu0 0.0
  %1764 = vmatprep.subr.mxu0 0.0
  %1765 = vmatpush1.msra.mxu0 0.0
  %1766 = vmatprep.subr.mxu0 0.0
  %1767 = vmatpush1.msra.mxu0 0.0
  %1768 = vmatprep.mubr.f32.mxu0 0.0
  %v1769 = vand.u32 %v1133, 4294901760
  %1770 = vmatmul.mubr.f32.gmra.mrb[0].mxu0 %v1769
  %v1771 = vpop.f32.mrb[0].mxu0
  %v1772 = vadd.f32 %v1685, %v1771
  %v1773 = vpop.f32.mrb[0].mxu0
  %1774 = vdwg.mxu0
  %v1775 = vmul.f32 %v1772, 0.032258064
  %s1776 = sld [smem:[#allocation2]]
  %v1777 = vmul.f32 %v1775, 0.01
  %v1778 = vstv %s1776
  %v1779 = vsub.f32 %v1778, %v1777
  %vm1780 = vcmask 27648
  %1781 = vst.msk [vmem:[%s4] sm:$0xf] %vm1780, %v1779
  // Predicated region
  $region18: #{_confidence_impl.1} parent=0 // pred_check
    _
  $region19: #{_confidence_impl.1} parent=0 // pred_check_branch
    %1783 = sbr.rel (0) target = $region21
  $region20: #{_confidence_impl.1} parent=0 // pred_region
    _
  $region21: #{_confidence_impl.1} parent=0 // pred_fallthru
    _
  // Predicated region
  $region22: #{_confidence_impl.1} parent=0 // pred_check
    _
  $region23: #{_confidence_impl.1} parent=0 // pred_check_branch
    %1785 = sbr.rel (0) target = $region25
  $region24: #{_confidence_impl.1} parent=0 // pred_region
    _
  $region25: #{_confidence_impl.1} parent=0 // pred_fallthru
    _

</llo_original>
